<compile_context>
chip_gen: v5e
topology: v5e:2x2
jax: 0.10.0
libtpu: 0.0.40
codegen_flags: <defaults>
</compile_context>

<pallas_src>
import functools

import jax
import jax.numpy as jnp
from jax.experimental import pallas as pl
from jax.experimental.pallas import tpu as pltpu

BN_EPS = 1e-5


def _round_up(v, m):
    return ((v + m - 1) // m) * m


# ----------------------------------------------------------------------------
# Kernel body: one grid step == one GIN layer (plus init / final readout).
# ----------------------------------------------------------------------------
def _dropgin_kernel(a_ref, x_ref, keep_ref, w1_ref, b1_ref, w2_ref, b2_ref,
                    q_ref, scale_ref, wf_ref, bf_ref, o_ref,
                    h_ref, pooled_ref, *, num_layers):
    """Refs (padded; DP/OP multiples of 128, NP multiple of 8, GP multiple of 8):
         a_ref     : (NP, NP)          bf16  adjacency with (1+eps)*I folded in
         x_ref     : (NP, DP)          bf16  node features (passed once)
         keep_ref  : (R, NP, 1)        f32   per-(run, node) keep mask
         w1_ref    : (1, DP, DP)       bf16  this layer's Linear1 (BN1 folded)
         b1_ref    : (1, 1, DP)        f32
         w2_ref    : (1, DP, DP)       bf16  this layer's Linear2 (outer BN folded)
         b2_ref    : (1, 1, DP)        f32
         q_ref     : (GP, R*NP)        bf16  exact 0/1 graph-membership indicator
         scale_ref : (GP, 1)           f32   1 / (nodes_in_graph * num_runs)
         wf_ref    : ((L+1)*DP, OP)    bf16  per-depth readout Linears, concatenated
         bf_ref    : (1, OP)           f32   pre-summed readout biases
         o_ref     : (GP, OP)          f32   output
         h_ref     : (R*NP, DP)        f32   VMEM scratch, carried across layers
         pooled_ref: (GP, (L+1)*DP)    f32   VMEM scratch, per-depth pooled blocks
    """
    layer = pl.program_id(0)
    num_runs, n_pad, _ = keep_ref.shape
    dp = h_ref.shape[1]

    # ---- step 0: broadcast features across runs, apply the node-drop mask,
    #      and emit the depth-0 pooled block (readout of the dropped inputs).
    @pl.when(layer == 0)
    def _init():
        xf = x_ref[...].astype(jnp.float32)                         # (NP, DP)
        for r in range(num_runs):
            h_ref[pl.ds(r * n_pad, n_pad), :] = xf * keep_ref[r]
        pooled_ref[:, pl.ds(0, dp)] = jnp.dot(
            q_ref[...], h_ref[...].astype(jnp.bfloat16),
            preferred_element_type=jnp.float32)

    # ---- GIN 'add' aggregation, self-term already folded into A_hat:
    #      one small (NP,NP)@(NP,DP) matmul per run, written back in place.
    for r in range(num_runs):
        rows = pl.ds(r * n_pad, n_pad)
        h_r = h_ref[rows, :].astype(jnp.bfloat16)
        h_ref[rows, :] = jnp.dot(a_ref[...], h_r,
                                 preferred_element_type=jnp.float32)

    # ---- MLP with BNs folded: Linear1 -> ReLU -> Linear2 -> ReLU, all runs
    #      processed as one (R*NP, DP) matrix to keep the MXU fed.
    s = h_ref[...].astype(jnp.bfloat16)
    z = jnp.dot(s, w1_ref[0], preferred_element_type=jnp.float32) + b1_ref[0]
    z = jnp.maximum(z, 0.0)
    h = jnp.dot(z.astype(jnp.bfloat16), w2_ref[0],
                preferred_element_type=jnp.float32) + b2_ref[0]
    h = jnp.maximum(h, 0.0)
    h_ref[...] = h

    # ---- depth-(layer+1) pooled block: exact 0/1 indicator pooling; the
    #      per-graph 1/(count*R) scaling is deferred to the final readout.
    pooled = jnp.dot(q_ref[...], h.astype(jnp.bfloat16),
                     preferred_element_type=jnp.float32)            # (GP, DP)
    for d in range(num_layers):          # static lane offsets (no dynamic vst)
        @pl.when(layer == d)
        def _store(d=d):
            pooled_ref[:, pl.ds((d + 1) * dp, dp)] = pooled

    # ---- last step: ONE wide-K readout matmul over all depths at once.
    @pl.when(layer == num_layers - 1)
    def _readout():
        proj = jnp.dot(pooled_ref[...].astype(jnp.bfloat16), wf_ref[...],
                       preferred_element_type=jnp.float32)           # (GP, OP)
        o_ref[...] = scale_ref[...] * proj + bf_ref[...]


# ----------------------------------------------------------------------------
# Host wrapper: builds padded / folded operands and launches the kernel.
# ----------------------------------------------------------------------------
def dropgin_forward(x, edge_index, batch, key, *, num_runs, p,
                    layer_params, fc_params, num_graphs):
    N, F = x.shape
    hidden = layer_params[0][4].shape[0]            # W2 is (hidden, hidden)
    num_out = fc_params[0][0].shape[1]
    num_layers = len(layer_params)

    NP = _round_up(N, 8)                            # sublane-aligned node block
    DP = _round_up(max(F, hidden), 128)             # lane-dense feature/hidden
    OP = _round_up(num_out, 128)                    # lane-dense readout dim
    GP = _round_up(num_graphs, 8)                   # sublane-aligned output rows
    RNP = num_runs * NP
    KD = (num_layers + 1) * DP                      # wide-K readout contraction

    def pad2(a, rows, cols):
        return jnp.pad(a, ((0, rows - a.shape[0]), (0, cols - a.shape[1])))

    # Shared per-run adjacency with the GIN self-term folded in (eps = 0):
    # A_hat[dst, src] = edge multiplicity, plus 1 on the diagonal of real nodes.
    diag = jnp.concatenate([jnp.ones((N,), jnp.float32),
                            jnp.zeros((NP - N,), jnp.float32)])
    A_hat = (jnp.zeros((NP, NP), jnp.float32)
             .at[edge_index[1], edge_index[0]].add(1.0)
             + jnp.diag(diag)).astype(jnp.bfloat16)

    # Features passed once; per-(run, node) keep mask applied in-kernel.
    x_pad = pad2(x, NP, DP).astype(jnp.bfloat16)                       # (NP, DP)
    drop = jax.random.bernoulli(key, p=p, shape=(num_runs, N))
    keep = jnp.pad(jnp.where(drop, 0.0, 1.0).astype(jnp.float32),
                   ((0, 0), (0, NP - N)))[:, :, None]                  # (R, NP, 1)

    # Pooling: exact 0/1 bf16 indicator; 1/(count_g * R) applied in f32 later.
    onehot = (batch[None, :] == jnp.arange(num_graphs)[:, None]).astype(jnp.float32)
    Q = jnp.tile(pad2(onehot, GP, NP), (1, num_runs)).astype(jnp.bfloat16)  # (GP, RNP)
    counts = jnp.maximum(onehot.sum(axis=1), 1.0)
    scale = jnp.pad(1.0 / (counts * num_runs),
                    (0, GP - num_graphs))[:, None].astype(jnp.float32)       # (GP, 1)

    # Eval-mode BNs folded into the MLP Linears; lane-padded; stacked per layer.
    W1s, B1s, W2s, B2s = [], [], [], []
    for (w1, b1, s1, t1, w2, b2, s2, t2) in layer_params:
        W1s.append(pad2(w1 * s1, DP, DP))
        B1s.append(pad2(b1 * s1 + t1, 1, DP))
        W2s.append(pad2(w2 * s2, DP, DP))
        B2s.append(pad2(b2 * s2 + t2, 1, DP))
    W1s = jnp.stack(W1s).astype(jnp.bfloat16)        # (L, DP, DP)
    B1s = jnp.stack(B1s)                             # (L, 1, DP) f32
    W2s = jnp.stack(W2s).astype(jnp.bfloat16)
    B2s = jnp.stack(B2s)

    # Per-depth readout Linears concatenated along the contraction dim so the
    # kernel does ONE wide-K matmul; biases pre-summed.
    WF_cat = jnp.concatenate([pad2(wf, DP, OP) for wf, _ in fc_params],
                             axis=0).astype(jnp.bfloat16)            # (KD, OP)
    BF_sum = jnp.sum(jnp.stack([pad2(bf, 1, OP) for _, bf in fc_params]),
                     axis=0)                                          # (1, OP)

    kernel = functools.partial(_dropgin_kernel, num_layers=num_layers)
    grid_spec = pltpu.PrefetchScalarGridSpec(
        num_scalar_prefetch=0,
        grid=(num_layers,),
        in_specs=[
            # Resident operands (constant block index => DMA'd once, kept in VMEM).
            pl.BlockSpec((NP, NP), lambda l: (0, 0)),               # A_hat
            pl.BlockSpec((NP, DP), lambda l: (0, 0)),               # x (once)
            pl.BlockSpec((num_runs, NP, 1), lambda l: (0, 0, 0)),   # keep mask
            # Per-layer weights: pipelined (double-buffered) across the grid.
            pl.BlockSpec((1, DP, DP), lambda l: (l, 0, 0)),         # W1[l]
            pl.BlockSpec((1, 1, DP), lambda l: (l, 0, 0)),          # B1[l]
            pl.BlockSpec((1, DP, DP), lambda l: (l, 0, 0)),         # W2[l]
            pl.BlockSpec((1, 1, DP), lambda l: (l, 0, 0)),          # B2[l]
            # Readout operands (resident).
            pl.BlockSpec((GP, RNP), lambda l: (0, 0)),              # Q indicator
            pl.BlockSpec((GP, 1), lambda l: (0, 0)),                # per-graph scale
            pl.BlockSpec((KD, OP), lambda l: (0, 0)),               # WF concat
            pl.BlockSpec((1, OP), lambda l: (0, 0)),                # BF sum
        ],
        out_specs=pl.BlockSpec((GP, OP), lambda l: (0, 0)),
        scratch_shapes=[
            pltpu.VMEM((RNP, DP), jnp.float32),                     # h (carried)
            pltpu.VMEM((GP, KD), jnp.float32),                      # pooled blocks
        ],
    )
    out_pad = pl.pallas_call(
        kernel,
        out_shape=jax.ShapeDtypeStruct((GP, OP), jnp.float32),
        grid_spec=grid_spec,
        compiler_params=pltpu.CompilerParams(
            dimension_semantics=("arbitrary",),        # layer axis carries state
            vmem_limit_bytes=32 * 1024 * 1024),
    )(A_hat, x_pad, keep, W1s, B1s, W2s, B2s, Q, scale, WF_cat, BF_sum)
    return out_pad[:num_graphs, :num_out]


# ----------------------------------------------------------------------------
# Pure-JAX f32 reference (eval mode) for correctness checking.
# ----------------------------------------------------------------------------
def reference_forward(x, edge_index, batch, key, *, num_runs, p,
                      layer_params, fc_params, num_graphs):
    N, _ = x.shape
    drop = jax.random.bernoulli(key, p=p, shape=(num_runs, N))
    h = jnp.where(drop[:, :, None], 0.0,
                  jnp.broadcast_to(x[None], (num_runs,) + x.shape))
    A = jnp.zeros((N, N), jnp.float32).at[edge_index[1], edge_index[0]].add(1.0)
    outs = [h]
    for (w1, b1, s1, t1, w2, b2, s2, t2) in layer_params:
        agg = jnp.einsum('ij,rjd->rid', A, h) + h           # GIN add-aggr, eps=0
        z = jnp.maximum((agg @ w1 + b1) * s1 + t1, 0.0)     # Linear1 + BN1 + ReLU
        h = jnp.maximum((z @ w2 + b2) * s2 + t2, 0.0)       # Linear2 + BN + ReLU
        outs.append(h)
    onehot = (batch[None, :] == jnp.arange(num_graphs)[:, None]).astype(jnp.float32)
    counts = jnp.maximum(onehot.sum(axis=1, keepdims=True), 1.0)
    out = None
    for h_d, (wf, bf) in zip(outs, fc_params):
        pooled = (onehot @ h_d.mean(axis=0)) / counts       # run-mean, graph-mean
        o = pooled @ wf + bf
        out = o if out is None else out + o
    return out


# ----------------------------------------------------------------------------
# Parameter construction (deterministic, PyTorch-default-like init)
# ----------------------------------------------------------------------------
def _linear_params(key, fan_in, fan_out):
    kw, kb = jax.random.split(key)
    bound = 1.0 / jnp.sqrt(fan_in)
    w = jax.random.uniform(kw, (fan_in, fan_out), jnp.float32, -bound, bound)
    b = jax.random.uniform(kb, (1, fan_out), jnp.float32, -bound, bound)
    return w, b


def _bn_fold(key, dim):
    kg, kb = jax.random.split(key)
    gamma = 1.0 + 0.1 * jax.random.normal(kg, (1, dim), jnp.float32)
    beta = 0.1 * jax.random.normal(kb, (1, dim), jnp.float32)
    running_mean = jnp.zeros((1, dim), jnp.float32)
    running_var = jnp.ones((1, dim), jnp.float32)
    scale = gamma / jnp.sqrt(running_var + BN_EPS)
    shift = beta - running_mean * scale
    return scale, shift


def build_params(key, num_features, hidden, num_outputs, num_layers):
    layers, fcs = [], []
    keys = jax.random.split(key, 6 * num_layers + 2 * (num_layers + 1))
    ki = 0
    for i in range(num_layers):
        din = num_features if i == 0 else hidden
        w1, b1 = _linear_params(keys[ki], din, hidden); ki += 1
        s1, t1 = _bn_fold(keys[ki], hidden); ki += 1
        w2, b2 = _linear_params(keys[ki], hidden, hidden); ki += 1
        _ = keys[ki]; ki += 1
        s2, t2 = _bn_fold(keys[ki], hidden); ki += 1     # outer bns[i]
        _ = keys[ki]; ki += 1
        layers.append((w1, b1, s1, t1, w2, b2, s2, t2))
    for i in range(num_layers + 1):
        din = num_features if i == 0 else hidden
        wf, bf = _linear_params(keys[ki], din, num_outputs); ki += 1
        _ = keys[ki]; ki += 1
        fcs.append((wf, bf))
    return layers, fcs


# ----------------------------------------------------------------------------
if __name__ == "__main__":
    key = jax.random.PRNGKey(0)

    NUM_RUNS = 4
    NUM_NODES = 16
    NUM_FEATURES = 16
    HIDDEN = 32
    NUM_OUTPUTS = 3
    NUM_LAYERS = 4
    NUM_GRAPHS = 2
    P_DROP = 0.2

    k_x, k_drop, k_par = jax.random.split(key, 3)

    # data.x
    x = jax.random.normal(k_x, (NUM_NODES, NUM_FEATURES), jnp.float32)

    # data.edge_index: bidirectional ring inside each graph
    src_list, dst_list = [], []
    n_per = NUM_NODES // NUM_GRAPHS
    for g in range(NUM_GRAPHS):
        base = g * n_per
        for i in range(n_per):
            a, b = base + i, base + (i + 1) % n_per
            src_list += [a, b]
            dst_list += [b, a]
    edge_index = jnp.array([src_list, dst_list], dtype=jnp.int32)   # (2, E)

    # data.batch
    batch = jnp.repeat(jnp.arange(NUM_GRAPHS, dtype=jnp.int32), n_per)

    layer_params, fc_params = build_params(
        k_par, NUM_FEATURES, HIDDEN, NUM_OUTPUTS, NUM_LAYERS)

    fwd = jax.jit(functools.partial(
        dropgin_forward, num_runs=NUM_RUNS, p=P_DROP, num_graphs=NUM_GRAPHS))
    out = fwd(x, edge_index, batch, k_drop,
              layer_params=layer_params, fc_params=fc_params)
    out = jax.block_until_ready(out)

    ref = reference_forward(x, edge_index, batch, k_drop,
                            num_runs=NUM_RUNS, p=P_DROP,
                            layer_params=layer_params, fc_params=fc_params,
                            num_graphs=NUM_GRAPHS)
    ref = jax.block_until_ready(ref)

    assert out.shape == (NUM_GRAPHS, NUM_OUTPUTS)
    assert bool(jnp.all(jnp.isfinite(out)))
    err = float(jnp.max(jnp.abs(out - ref)))
    tol = 5e-2 * (1.0 + float(jnp.max(jnp.abs(ref))))
    assert err < tol, f"kernel/reference mismatch: max_abs_err={err:.3e} tol={tol:.3e}"
    print("KERNEL_OK")
</pallas_src>

<mosaic_0001>
module attributes {stable_mosaic.version = 11 : i64} {
  func.func @_dropgin_kernel(%arg0: i32, %arg1: memref<16x16xbf16, #tpu.memory_space<vmem>>, %arg2: memref<16x128xbf16, #tpu.memory_space<vmem>>, %arg3: memref<4x16x1xf32, #tpu.memory_space<vmem>>, %arg4: memref<1x128x128xbf16, #tpu.memory_space<vmem>>, %arg5: memref<1x1x128xf32, #tpu.memory_space<vmem>>, %arg6: memref<1x128x128xbf16, #tpu.memory_space<vmem>>, %arg7: memref<1x1x128xf32, #tpu.memory_space<vmem>>, %arg8: memref<8x64xbf16, #tpu.memory_space<vmem>>, %arg9: memref<8x1xf32, #tpu.memory_space<vmem>>, %arg10: memref<640x128xbf16, #tpu.memory_space<vmem>>, %arg11: memref<1x128xf32, #tpu.memory_space<vmem>>, %arg12: memref<8x128xf32, #tpu.memory_space<vmem>>, %arg13: memref<64x128xf32, #tpu.memory_space<vmem>>, %arg14: memref<8x640xf32, #tpu.memory_space<vmem>>) attributes {dimension_semantics = [#tpu.dimension_semantics<arbitrary>], iteration_bounds = array<i64: 4>, scalar_prefetch = 0 : i64, scratch_operands = 2 : i64, tpu.core_type = #tpu.core_type<tc>, window_params = [{pipeline_mode = #tpu.pipeline_mode<synchronous>, transform_indices = @transform_0, window_bounds = array<i64: 16, 16>}, {pipeline_mode = #tpu.pipeline_mode<synchronous>, transform_indices = @transform_1, window_bounds = array<i64: 16, 128>}, {pipeline_mode = #tpu.pipeline_mode<synchronous>, transform_indices = @transform_2, window_bounds = array<i64: 4, 16, 1>}, {transform_indices = @transform_3, window_bounds = array<i64: 1, 128, 128>}, {transform_indices = @transform_4, window_bounds = array<i64: 1, 1, 128>}, {transform_indices = @transform_5, window_bounds = array<i64: 1, 128, 128>}, {transform_indices = @transform_6, window_bounds = array<i64: 1, 1, 128>}, {pipeline_mode = #tpu.pipeline_mode<synchronous>, transform_indices = @transform_7, window_bounds = array<i64: 8, 64>}, {pipeline_mode = #tpu.pipeline_mode<synchronous>, transform_indices = @transform_8, window_bounds = array<i64: 8, 1>}, {pipeline_mode = #tpu.pipeline_mode<synchronous>, transform_indices = @transform_9, window_bounds = array<i64: 640, 128>}, {pipeline_mode = #tpu.pipeline_mode<synchronous>, transform_indices = @transform_10, window_bounds = array<i64: 1, 128>}, {pipeline_mode = #tpu.pipeline_mode<synchronous>, transform_indices = @transform_11, window_bounds = array<i64: 8, 128>}]} {
    %c0_i32 = arith.constant 0 : i32
    %0 = arith.cmpi eq, %arg0, %c0_i32 : i32
    %1 = arith.extui %0 : i1 to i32
    %c0_i32_0 = arith.constant 0 : i32
    %2 = arith.cmpi ne, %1, %c0_i32_0 : i32
    scf.if %2 {
      %c0_54 = arith.constant 0 : index
      %c0_55 = arith.constant 0 : index
      %63 = vector.load %arg2[%c0_54, %c0_55] : memref<16x128xbf16, #tpu.memory_space<vmem>>, vector<16x128xbf16>
      %64 = arith.extf %63 : vector<16x128xbf16> to vector<16x128xf32>
      %c0_56 = arith.constant 0 : index
      %c0_57 = arith.constant 0 : index
      %c0_58 = arith.constant 0 : index
      %65 = vector.load %arg3[%c0_56, %c0_57, %c0_58] : memref<4x16x1xf32, #tpu.memory_space<vmem>>, vector<1x16x1xf32>
      %66 = vector.shape_cast %65 : vector<1x16x1xf32> to vector<16x1xf32>
      %67 = vector.broadcast %66 : vector<16x1xf32> to vector<16x128xf32>
      %68 = arith.mulf %64, %67 : vector<16x128xf32>
      %c0_59 = arith.constant 0 : index
      %c0_60 = arith.constant 0 : index
      %69 = vector.load %arg13[%c0_59, %c0_60] : memref<64x128xf32, #tpu.memory_space<vmem>>, vector<16x128xf32>
      tpu.vector_store %arg13[%c0_59, %c0_60], %68 {strides = array<i32>} : memref<64x128xf32, #tpu.memory_space<vmem>>, vector<16x128xf32>,
      %c1 = arith.constant 1 : index
      %c0_61 = arith.constant 0 : index
      %c0_62 = arith.constant 0 : index
      %70 = vector.load %arg3[%c1, %c0_61, %c0_62] : memref<4x16x1xf32, #tpu.memory_space<vmem>>, vector<1x16x1xf32>
      %71 = vector.shape_cast %70 : vector<1x16x1xf32> to vector<16x1xf32>
      %72 = vector.broadcast %71 : vector<16x1xf32> to vector<16x128xf32>
      %73 = arith.mulf %64, %72 : vector<16x128xf32>
      %c16_63 = arith.constant 16 : index
      %c0_64 = arith.constant 0 : index
      %74 = vector.load %arg13[%c16_63, %c0_64] : memref<64x128xf32, #tpu.memory_space<vmem>>, vector<16x128xf32>
      tpu.vector_store %arg13[%c16_63, %c0_64], %73 {strides = array<i32>} : memref<64x128xf32, #tpu.memory_space<vmem>>, vector<16x128xf32>,
      %c2 = arith.constant 2 : index
      %c0_65 = arith.constant 0 : index
      %c0_66 = arith.constant 0 : index
      %75 = vector.load %arg3[%c2, %c0_65, %c0_66] : memref<4x16x1xf32, #tpu.memory_space<vmem>>, vector<1x16x1xf32>
      %76 = vector.shape_cast %75 : vector<1x16x1xf32> to vector<16x1xf32>
      %77 = vector.broadcast %76 : vector<16x1xf32> to vector<16x128xf32>
      %78 = arith.mulf %64, %77 : vector<16x128xf32>
      %c32_67 = arith.constant 32 : index
      %c0_68 = arith.constant 0 : index
      %79 = vector.load %arg13[%c32_67, %c0_68] : memref<64x128xf32, #tpu.memory_space<vmem>>, vector<16x128xf32>
      tpu.vector_store %arg13[%c32_67, %c0_68], %78 {strides = array<i32>} : memref<64x128xf32, #tpu.memory_space<vmem>>, vector<16x128xf32>,
      %c3 = arith.constant 3 : index
      %c0_69 = arith.constant 0 : index
      %c0_70 = arith.constant 0 : index
      %80 = vector.load %arg3[%c3, %c0_69, %c0_70] : memref<4x16x1xf32, #tpu.memory_space<vmem>>, vector<1x16x1xf32>
      %81 = vector.shape_cast %80 : vector<1x16x1xf32> to vector<16x1xf32>
      %82 = vector.broadcast %81 : vector<16x1xf32> to vector<16x128xf32>
      %83 = arith.mulf %64, %82 : vector<16x128xf32>
      %c48_71 = arith.constant 48 : index
      %c0_72 = arith.constant 0 : index
      %84 = vector.load %arg13[%c48_71, %c0_72] : memref<64x128xf32, #tpu.memory_space<vmem>>, vector<16x128xf32>
      tpu.vector_store %arg13[%c48_71, %c0_72], %83 {strides = array<i32>} : memref<64x128xf32, #tpu.memory_space<vmem>>, vector<16x128xf32>,
      %c0_73 = arith.constant 0 : index
      %c0_74 = arith.constant 0 : index
      %85 = vector.load %arg8[%c0_73, %c0_74] : memref<8x64xbf16, #tpu.memory_space<vmem>>, vector<8x64xbf16>
      %c0_75 = arith.constant 0 : index
      %c0_76 = arith.constant 0 : index
      %86 = vector.load %arg13[%c0_75, %c0_76] : memref<64x128xf32, #tpu.memory_space<vmem>>, vector<64x128xf32>
      %87 = arith.truncf %86 : vector<64x128xf32> to vector<64x128xbf16>
      %cst_77 = arith.constant dense<0.000000e+00> : vector<8x128xf32>
      %88 = tpu.matmul %85, %87, %cst_77 {dimension_numbers = #tpu.dot_dimension_numbers<[1], [0], [0], [1], [0, 0, 1, 1], [], []>} : vector<8x64xbf16>, vector<64x128xbf16>, vector<8x128xf32> -> vector<8x128xf32>
      %c0_78 = arith.constant 0 : index
      %c0_79 = arith.constant 0 : index
      %89 = vector.load %arg14[%c0_78, %c0_79] : memref<8x640xf32, #tpu.memory_space<vmem>>, vector<8x128xf32>
      tpu.vector_store %arg14[%c0_78, %c0_79], %88 {strides = array<i32>} : memref<8x640xf32, #tpu.memory_space<vmem>>, vector<8x128xf32>,
    } else {
    }
    %c0 = arith.constant 0 : index
    %c0_1 = arith.constant 0 : index
    %3 = vector.load %arg13[%c0, %c0_1] : memref<64x128xf32, #tpu.memory_space<vmem>>, vector<16x128xf32>
    %4 = arith.truncf %3 : vector<16x128xf32> to vector<16x128xbf16>
    %c0_2 = arith.constant 0 : index
    %c0_3 = arith.constant 0 : index
    %5 = vector.load %arg1[%c0_2, %c0_3] : memref<16x16xbf16, #tpu.memory_space<vmem>>, vector<16x16xbf16>
    %cst = arith.constant dense<0.000000e+00> : vector<16x128xf32>
    %6 = tpu.matmul %5, %4, %cst {dimension_numbers = #tpu.dot_dimension_numbers<[1], [0], [0], [1], [0, 0, 1, 1], [], []>} : vector<16x16xbf16>, vector<16x128xbf16>, vector<16x128xf32> -> vector<16x128xf32>
    %c0_4 = arith.constant 0 : index
    %c0_5 = arith.constant 0 : index
    %7 = vector.load %arg13[%c0_4, %c0_5] : memref<64x128xf32, #tpu.memory_space<vmem>>, vector<16x128xf32>
    tpu.vector_store %arg13[%c0_4, %c0_5], %6 {strides = array<i32>} : memref<64x128xf32, #tpu.memory_space<vmem>>, vector<16x128xf32>,
    %c16 = arith.constant 16 : index
    %c0_6 = arith.constant 0 : index
    %8 = vector.load %arg13[%c16, %c0_6] : memref<64x128xf32, #tpu.memory_space<vmem>>, vector<16x128xf32>
    %9 = arith.truncf %8 : vector<16x128xf32> to vector<16x128xbf16>
    %c0_7 = arith.constant 0 : index
    %c0_8 = arith.constant 0 : index
    %10 = vector.load %arg1[%c0_7, %c0_8] : memref<16x16xbf16, #tpu.memory_space<vmem>>, vector<16x16xbf16>
    %cst_9 = arith.constant dense<0.000000e+00> : vector<16x128xf32>
    %11 = tpu.matmul %10, %9, %cst_9 {dimension_numbers = #tpu.dot_dimension_numbers<[1], [0], [0], [1], [0, 0, 1, 1], [], []>} : vector<16x16xbf16>, vector<16x128xbf16>, vector<16x128xf32> -> vector<16x128xf32>
    %c16_10 = arith.constant 16 : index
    %c0_11 = arith.constant 0 : index
    %12 = vector.load %arg13[%c16_10, %c0_11] : memref<64x128xf32, #tpu.memory_space<vmem>>, vector<16x128xf32>
    tpu.vector_store %arg13[%c16_10, %c0_11], %11 {strides = array<i32>} : memref<64x128xf32, #tpu.memory_space<vmem>>, vector<16x128xf32>,
    %c32 = arith.constant 32 : index
    %c0_12 = arith.constant 0 : index
    %13 = vector.load %arg13[%c32, %c0_12] : memref<64x128xf32, #tpu.memory_space<vmem>>, vector<16x128xf32>
    %14 = arith.truncf %13 : vector<16x128xf32> to vector<16x128xbf16>
    %c0_13 = arith.constant 0 : index
    %c0_14 = arith.constant 0 : index
    %15 = vector.load %arg1[%c0_13, %c0_14] : memref<16x16xbf16, #tpu.memory_space<vmem>>, vector<16x16xbf16>
    %cst_15 = arith.constant dense<0.000000e+00> : vector<16x128xf32>
    %16 = tpu.matmul %15, %14, %cst_15 {dimension_numbers = #tpu.dot_dimension_numbers<[1], [0], [0], [1], [0, 0, 1, 1], [], []>} : vector<16x16xbf16>, vector<16x128xbf16>, vector<16x128xf32> -> vector<16x128xf32>
    %c32_16 = arith.constant 32 : index
    %c0_17 = arith.constant 0 : index
    %17 = vector.load %arg13[%c32_16, %c0_17] : memref<64x128xf32, #tpu.memory_space<vmem>>, vector<16x128xf32>
    tpu.vector_store %arg13[%c32_16, %c0_17], %16 {strides = array<i32>} : memref<64x128xf32, #tpu.memory_space<vmem>>, vector<16x128xf32>,
    %c48 = arith.constant 48 : index
    %c0_18 = arith.constant 0 : index
    %18 = vector.load %arg13[%c48, %c0_18] : memref<64x128xf32, #tpu.memory_space<vmem>>, vector<16x128xf32>
    %19 = arith.truncf %18 : vector<16x128xf32> to vector<16x128xbf16>
    %c0_19 = arith.constant 0 : index
    %c0_20 = arith.constant 0 : index
    %20 = vector.load %arg1[%c0_19, %c0_20] : memref<16x16xbf16, #tpu.memory_space<vmem>>, vector<16x16xbf16>
    %cst_21 = arith.constant dense<0.000000e+00> : vector<16x128xf32>
    %21 = tpu.matmul %20, %19, %cst_21 {dimension_numbers = #tpu.dot_dimension_numbers<[1], [0], [0], [1], [0, 0, 1, 1], [], []>} : vector<16x16xbf16>, vector<16x128xbf16>, vector<16x128xf32> -> vector<16x128xf32>
    %c48_22 = arith.constant 48 : index
    %c0_23 = arith.constant 0 : index
    %22 = vector.load %arg13[%c48_22, %c0_23] : memref<64x128xf32, #tpu.memory_space<vmem>>, vector<16x128xf32>
    tpu.vector_store %arg13[%c48_22, %c0_23], %21 {strides = array<i32>} : memref<64x128xf32, #tpu.memory_space<vmem>>, vector<16x128xf32>,
    %c0_24 = arith.constant 0 : index
    %c0_25 = arith.constant 0 : index
    %23 = vector.load %arg13[%c0_24, %c0_25] : memref<64x128xf32, #tpu.memory_space<vmem>>, vector<64x128xf32>
    %24 = arith.truncf %23 : vector<64x128xf32> to vector<64x128xbf16>
    %c0_26 = arith.constant 0 : index
    %c0_27 = arith.constant 0 : index
    %c0_28 = arith.constant 0 : index
    %25 = vector.load %arg4[%c0_26, %c0_27, %c0_28] : memref<1x128x128xbf16, #tpu.memory_space<vmem>>, vector<1x128x128xbf16>
    %26 = vector.shape_cast %25 : vector<1x128x128xbf16> to vector<128x128xbf16>
    %cst_29 = arith.constant dense<0.000000e+00> : vector<64x128xf32>
    %27 = tpu.matmul %24, %26, %cst_29 {dimension_numbers = #tpu.dot_dimension_numbers<[1], [0], [0], [1], [0, 0, 1, 1], [], []>} : vector<64x128xbf16>, vector<128x128xbf16>, vector<64x128xf32> -> vector<64x128xf32>
    %c0_30 = arith.constant 0 : index
    %c0_31 = arith.constant 0 : index
    %c0_32 = arith.constant 0 : index
    %28 = vector.load %arg5[%c0_30, %c0_31, %c0_32] : memref<1x1x128xf32, #tpu.memory_space<vmem>>, vector<1x1x128xf32>
    %29 = vector.shape_cast %28 : vector<1x1x128xf32> to vector<1x128xf32>
    %30 = vector.broadcast %29 : vector<1x128xf32> to vector<64x128xf32>
    %31 = arith.addf %27, %30 : vector<64x128xf32>
    %cst_33 = arith.constant 0.000000e+00 : f32
    %32 = vector.broadcast %cst_33 : f32 to vector<64x128xf32>
    %33 = arith.maximumf %31, %32 : vector<64x128xf32>
    %34 = arith.truncf %33 : vector<64x128xf32> to vector<64x128xbf16>
    %c0_34 = arith.constant 0 : index
    %c0_35 = arith.constant 0 : index
    %c0_36 = arith.constant 0 : index
    %35 = vector.load %arg6[%c0_34, %c0_35, %c0_36] : memref<1x128x128xbf16, #tpu.memory_space<vmem>>, vector<1x128x128xbf16>
    %36 = vector.shape_cast %35 : vector<1x128x128xbf16> to vector<128x128xbf16>
    %cst_37 = arith.constant dense<0.000000e+00> : vector<64x128xf32>
    %37 = tpu.matmul %34, %36, %cst_37 {dimension_numbers = #tpu.dot_dimension_numbers<[1], [0], [0], [1], [0, 0, 1, 1], [], []>} : vector<64x128xbf16>, vector<128x128xbf16>, vector<64x128xf32> -> vector<64x128xf32>
    %c0_38 = arith.constant 0 : index
    %c0_39 = arith.constant 0 : index
    %c0_40 = arith.constant 0 : index
    %38 = vector.load %arg7[%c0_38, %c0_39, %c0_40] : memref<1x1x128xf32, #tpu.memory_space<vmem>>, vector<1x1x128xf32>
    %39 = vector.shape_cast %38 : vector<1x1x128xf32> to vector<1x128xf32>
    %40 = vector.broadcast %39 : vector<1x128xf32> to vector<64x128xf32>
    %41 = arith.addf %37, %40 : vector<64x128xf32>
    %cst_41 = arith.constant 0.000000e+00 : f32
    %42 = vector.broadcast %cst_41 : f32 to vector<64x128xf32>
    %43 = arith.maximumf %41, %42 : vector<64x128xf32>
    %c0_42 = arith.constant 0 : index
    %c0_43 = arith.constant 0 : index
    %44 = vector.load %arg13[%c0_42, %c0_43] : memref<64x128xf32, #tpu.memory_space<vmem>>, vector<64x128xf32>
    tpu.vector_store %arg13[%c0_42, %c0_43], %43 {strides = array<i32>} : memref<64x128xf32, #tpu.memory_space<vmem>>, vector<64x128xf32>,
    %c0_44 = arith.constant 0 : index
    %c0_45 = arith.constant 0 : index
    %45 = vector.load %arg8[%c0_44, %c0_45] : memref<8x64xbf16, #tpu.memory_space<vmem>>, vector<8x64xbf16>
    %46 = arith.truncf %43 : vector<64x128xf32> to vector<64x128xbf16>
    %cst_46 = arith.constant dense<0.000000e+00> : vector<8x128xf32>
    %47 = tpu.matmul %45, %46, %cst_46 {dimension_numbers = #tpu.dot_dimension_numbers<[1], [0], [0], [1], [0, 0, 1, 1], [], []>} : vector<8x64xbf16>, vector<64x128xbf16>, vector<8x128xf32> -> vector<8x128xf32>
    %c0_i32_47 = arith.constant 0 : i32
    %48 = arith.cmpi eq, %arg0, %c0_i32_47 : i32
    %49 = arith.extui %48 : i1 to i32
    %c0_i32_48 = arith.constant 0 : i32
    %50 = arith.cmpi ne, %49, %c0_i32_48 : i32
    scf.if %50 {
      %c0_54 = arith.constant 0 : index
      %c128 = arith.constant 128 : index
      %63 = vector.load %arg14[%c0_54, %c128] : memref<8x640xf32, #tpu.memory_space<vmem>>, vector<8x128xf32>
      tpu.vector_store %arg14[%c0_54, %c128], %47 {strides = array<i32>} : memref<8x640xf32, #tpu.memory_space<vmem>>, vector<8x128xf32>,
    } else {
    }
    %c1_i32 = arith.constant 1 : i32
    %51 = arith.cmpi eq, %arg0, %c1_i32 : i32
    %52 = arith.extui %51 : i1 to i32
    %c0_i32_49 = arith.constant 0 : i32
    %53 = arith.cmpi ne, %52, %c0_i32_49 : i32
    scf.if %53 {
      %c0_54 = arith.constant 0 : index
      %c256 = arith.constant 256 : index
      %63 = vector.load %arg14[%c0_54, %c256] : memref<8x640xf32, #tpu.memory_space<vmem>>, vector<8x128xf32>
      tpu.vector_store %arg14[%c0_54, %c256], %47 {strides = array<i32>} : memref<8x640xf32, #tpu.memory_space<vmem>>, vector<8x128xf32>,
    } else {
    }
    %c2_i32 = arith.constant 2 : i32
    %54 = arith.cmpi eq, %arg0, %c2_i32 : i32
    %55 = arith.extui %54 : i1 to i32
    %c0_i32_50 = arith.constant 0 : i32
    %56 = arith.cmpi ne, %55, %c0_i32_50 : i32
    scf.if %56 {
      %c0_54 = arith.constant 0 : index
      %c384 = arith.constant 384 : index
      %63 = vector.load %arg14[%c0_54, %c384] : memref<8x640xf32, #tpu.memory_space<vmem>>, vector<8x128xf32>
      tpu.vector_store %arg14[%c0_54, %c384], %47 {strides = array<i32>} : memref<8x640xf32, #tpu.memory_space<vmem>>, vector<8x128xf32>,
    } else {
    }
    %c3_i32 = arith.constant 3 : i32
    %57 = arith.cmpi eq, %arg0, %c3_i32 : i32
    %58 = arith.extui %57 : i1 to i32
    %c0_i32_51 = arith.constant 0 : i32
    %59 = arith.cmpi ne, %58, %c0_i32_51 : i32
    scf.if %59 {
      %c0_54 = arith.constant 0 : index
      %c512 = arith.constant 512 : index
      %63 = vector.load %arg14[%c0_54, %c512] : memref<8x640xf32, #tpu.memory_space<vmem>>, vector<8x128xf32>
      tpu.vector_store %arg14[%c0_54, %c512], %47 {strides = array<i32>} : memref<8x640xf32, #tpu.memory_space<vmem>>, vector<8x128xf32>,
    } else {
    }
    %c3_i32_52 = arith.constant 3 : i32
    %60 = arith.cmpi eq, %arg0, %c3_i32_52 : i32
    %61 = arith.extui %60 : i1 to i32
    %c0_i32_53 = arith.constant 0 : i32
    %62 = arith.cmpi ne, %61, %c0_i32_53 : i32
    scf.if %62 {
      %c0_54 = arith.constant 0 : index
      %c0_55 = arith.constant 0 : index
      %63 = vector.load %arg14[%c0_54, %c0_55] : memref<8x640xf32, #tpu.memory_space<vmem>>, vector<8x640xf32>
      %64 = arith.truncf %63 : vector<8x640xf32> to vector<8x640xbf16>
      %c0_56 = arith.constant 0 : index
      %c0_57 = arith.constant 0 : index
      %65 = vector.load %arg10[%c0_56, %c0_57] : memref<640x128xbf16, #tpu.memory_space<vmem>>, vector<640x128xbf16>
      %cst_58 = arith.constant dense<0.000000e+00> : vector<8x128xf32>
      %66 = tpu.matmul %64, %65, %cst_58 {dimension_numbers = #tpu.dot_dimension_numbers<[1], [0], [0], [1], [0, 0, 1, 1], [], []>} : vector<8x640xbf16>, vector<640x128xbf16>, vector<8x128xf32> -> vector<8x128xf32>
      %c0_59 = arith.constant 0 : index
      %c0_60 = arith.constant 0 : index
      %67 = vector.load %arg9[%c0_59, %c0_60] : memref<8x1xf32, #tpu.memory_space<vmem>>, vector<8x1xf32>
      %68 = vector.broadcast %67 : vector<8x1xf32> to vector<8x128xf32>
      %69 = arith.mulf %68, %66 : vector<8x128xf32>
      %c0_61 = arith.constant 0 : index
      %c0_62 = arith.constant 0 : index
      %70 = vector.load %arg11[%c0_61, %c0_62] : memref<1x128xf32, #tpu.memory_space<vmem>>, vector<1x128xf32>
      %71 = vector.broadcast %70 : vector<1x128xf32> to vector<8x128xf32>
      %72 = arith.addf %69, %71 : vector<8x128xf32>
      %c0_63 = arith.constant 0 : index
      %c0_64 = arith.constant 0 : index
      %73 = vector.load %arg12[%c0_63, %c0_64] : memref<8x128xf32, #tpu.memory_space<vmem>>, vector<8x128xf32>
      tpu.vector_store %arg12[%c0_63, %c0_64], %72 {strides = array<i32>} : memref<8x128xf32, #tpu.memory_space<vmem>>, vector<8x128xf32>,
    } else {
    }
    return
  }
  func.func @transform_0(%arg0: i32) -> (i32, i32) {
    %c0_i32 = arith.constant 0 : i32
    %c0_i32_0 = arith.constant 0 : i32
    %c0_i32_1 = arith.constant 0 : i32
    return %c0_i32, %c0_i32_0 : i32, i32
  }
  func.func @transform_1(%arg0: i32) -> (i32, i32) {
    %c0_i32 = arith.constant 0 : i32
    %c0_i32_0 = arith.constant 0 : i32
    %c0_i32_1 = arith.constant 0 : i32
    return %c0_i32, %c0_i32_0 : i32, i32
  }
  func.func @transform_2(%arg0: i32) -> (i32, i32, i32) {
    %c0_i32 = arith.constant 0 : i32
    %c0_i32_0 = arith.constant 0 : i32
    %c0_i32_1 = arith.constant 0 : i32
    %c0_i32_2 = arith.constant 0 : i32
    return %c0_i32, %c0_i32_0, %c0_i32_1 : i32, i32, i32
  }
  func.func @transform_3(%arg0: i32) -> (i32, i32, i32) {
    %c0_i32 = arith.constant 0 : i32
    %c0_i32_0 = arith.constant 0 : i32
    %c0_i32_1 = arith.constant 0 : i32
    return %arg0, %c0_i32, %c0_i32_0 : i32, i32, i32
  }
  func.func @transform_4(%arg0: i32) -> (i32, i32, i32) {
    %c0_i32 = arith.constant 0 : i32
    %c0_i32_0 = arith.constant 0 : i32
    %c0_i32_1 = arith.constant 0 : i32
    return %arg0, %c0_i32, %c0_i32_0 : i32, i32, i32
  }
  func.func @transform_5(%arg0: i32) -> (i32, i32, i32) {
    %c0_i32 = arith.constant 0 : i32
    %c0_i32_0 = arith.constant 0 : i32
    %c0_i32_1 = arith.constant 0 : i32
    return %arg0, %c0_i32, %c0_i32_0 : i32, i32, i32
  }
  func.func @transform_6(%arg0: i32) -> (i32, i32, i32) {
    %c0_i32 = arith.constant 0 : i32
    %c0_i32_0 = arith.constant 0 : i32
    %c0_i32_1 = arith.constant 0 : i32
    return %arg0, %c0_i32, %c0_i32_0 : i32, i32, i32
  }
  func.func @transform_7(%arg0: i32) -> (i32, i32) {
    %c0_i32 = arith.constant 0 : i32
    %c0_i32_0 = arith.constant 0 : i32
    %c0_i32_1 = arith.constant 0 : i32
    return %c0_i32, %c0_i32_0 : i32, i32
  }
  func.func @transform_8(%arg0: i32) -> (i32, i32) {
    %c0_i32 = arith.constant 0 : i32
    %c0_i32_0 = arith.constant 0 : i32
    %c0_i32_1 = arith.constant 0 : i32
    return %c0_i32, %c0_i32_0 : i32, i32
  }
  func.func @transform_9(%arg0: i32) -> (i32, i32) {
    %c0_i32 = arith.constant 0 : i32
    %c0_i32_0 = arith.constant 0 : i32
    %c0_i32_1 = arith.constant 0 : i32
    return %c0_i32, %c0_i32_0 : i32, i32
  }
  func.func @transform_10(%arg0: i32) -> (i32, i32) {
    %c0_i32 = arith.constant 0 : i32
    %c0_i32_0 = arith.constant 0 : i32
    %c0_i32_1 = arith.constant 0 : i32
    return %c0_i32, %c0_i32_0 : i32, i32
  }
  func.func @transform_11(%arg0: i32) -> (i32, i32) {
    %c0_i32 = arith.constant 0 : i32
    %c0_i32_0 = arith.constant 0 : i32
    %c0_i32_1 = arith.constant 0 : i32
    return %c0_i32, %c0_i32_0 : i32, i32
  }
}

</mosaic_0001>

<llo_original>
// kernel: dropgin_forward.1
$region0: #{dropgin_forward.1}
  #allocation0 [shape = 'u32[]', space=smem, size = 0x4, offset = 0x4, fixed_abs, tag = 'smem constant byte address 0x4 - core index']
  #allocation1 [shape = 'u32[72,128]{1,0:T(1,128)}', space=vmem, size = 0x9000, scoped, tag = 'internal scratch']
  #allocation2 [shape = 'f32[64,128]{1,0:T(8,128)}', space=vmem, size = 0x8000, scoped, tag = 'scratch operand']
  #allocation3 [shape = 'f32[8,640]{1,0:T(8,128)}', space=vmem, size = 0x5000, scoped, tag = 'scratch operand']
  %s0 = inlined_call_operand.vmem [shape: bf16[16,16], index: 0, kind: input, shape index: {}]
  %s1 = inlined_call_operand.vmem [shape: bf16[16,128], index: 1, kind: input, shape index: {}]
  %s2 = inlined_call_operand.vmem [shape: f32[4,16,1], index: 2, kind: input, shape index: {}]
  %s3 = inlined_call_operand.vmem [shape: bf16[4,128,128], index: 3, kind: input, shape index: {}]
  %s4 = inlined_call_operand.vmem [shape: f32[4,1,128], index: 4, kind: input, shape index: {}]
  %s5 = inlined_call_operand.vmem [shape: bf16[4,128,128], index: 5, kind: input, shape index: {}]
  %s6 = inlined_call_operand.vmem [shape: f32[4,1,128], index: 6, kind: input, shape index: {}]
  %s7 = inlined_call_operand.vmem [shape: bf16[8,64], index: 7, kind: input, shape index: {}]
  %s8 = inlined_call_operand.vmem [shape: f32[8,1], index: 8, kind: input, shape index: {}]
  %s9 = inlined_call_operand.vmem [shape: bf16[640,128], index: 9, kind: input, shape index: {}]
  %s10 = inlined_call_operand.vmem [shape: f32[1,128], index: 10, kind: input, shape index: {}]
  %s11 = inlined_call_operand.vmem [shape: f32[8,128], index: 11, kind: output, shape index: {}]
  %s12 = sld [smem:[#allocation0]]
  $region97: #{dropgin_forward.1} parent=0
    _
  %s14 = ssub.s32 1, %s12
  %s15 = scalar_select 0, %s14, %s12
  loop: start=0, step=1, limit=6
  $region2: #{dropgin_forward.1} parent=0 // loop_pre_header
    _
  $region3: #{dropgin_forward.1} parent=0 // loop_header
    %s17 = sphi 0, %s21
    %p18 = scmp.ge.s32.totalorder %s17, 6
    %s25 = sphi 0, %s25
    %s27 = sphi 0, %s25
    %s28 = sphi 0, %s27
    %s42 = sphi 0, %s28
    %s46 = sphi 0, %s46
    %s48 = sphi 0, %s46
    %s49 = sphi 0, %s48
    %s63 = sphi 0, %s49
    %s67 = sphi 0, %s67
    %s69 = sphi 0, %s67
    %s70 = sphi 0, %s69
    %s84 = sphi 0, %s70
    %s90 = sphi 0, %s92
    %s93 = sphi 0, %s90
    %s94 = sphi 0, %s93
    %s110 = sphi 0, %s94
    %s116 = sphi 0, %s118
    %s119 = sphi 0, %s116
    %s120 = sphi 0, %s119
    %s136 = sphi 0, %s120
    %s142 = sphi 0, %s144
    %s145 = sphi 0, %s142
    %s146 = sphi 0, %s145
    %s162 = sphi 0, %s146
    %s168 = sphi 0, %s170
    %s171 = sphi 0, %s168
    %s172 = sphi 0, %s171
    %s188 = sphi 0, %s172
    %s192 = sphi 0, %s192
    %s194 = sphi 0, %s192
    %s195 = sphi 0, %s194
    %s209 = sphi 0, %s195
    %s213 = sphi 0, %s213
    %s215 = sphi 0, %s213
    %s216 = sphi 0, %s215
    %s230 = sphi 0, %s216
    %s234 = sphi 0, %s234
    %s236 = sphi 0, %s234
    %s237 = sphi 0, %s236
    %s251 = sphi 0, %s237
    %s255 = sphi 0, %s255
    %s257 = sphi 0, %s255
    %s258 = sphi 0, %s257
    %s272 = sphi 0, %s258
    %s276 = sphi 0, %s276
    %s278 = sphi 0, %s276
    %s279 = sphi 0, %s278
    %s293 = sphi 0, %s279
  $region4: #{dropgin_forward.1} parent=0 // loop_header_branch
    %20 = sbr.rel (%p18) target = $region8
  $region5: #{dropgin_forward.1} parent=0 // loop_body
    %s22 = ssub.s32 %s17, 1
    %s23 = ssub.s32 %s17, 2
    %s24 = sadd.s32 %s17, 1
    %s26 = sadd.s32 %s25, 1
    %p29 = scmp.eq.s32.totalorder %s17, 3
    %p30 = scmp.ne.s32.totalorder %s25, %s27
    %p31 = scmp.eq.s32.totalorder %s17, 0
    %p32 = por %p30, %p31
    %p33 = scmp.ne.s32.totalorder %s25, %s27
    %p34 = scmp.eq.s32.totalorder %s22, 3
    %p35 = por %p33, %p34
    %p36 = scmp.ne.s32.totalorder %s27, %s28
    %p37 = scmp.eq.s32.totalorder %s22, 0
    %p38 = por %p36, %p37
    %p39 = scmp.ne.s32.totalorder %s27, %s28
    %p40 = scmp.eq.s32.totalorder %s23, 3
    %p41 = por %p39, %p40
    %p43 = scmp.ne.s32.totalorder %s28, %s42
    %p44 = scmp.eq.s32.totalorder %s23, 0
    %p45 = por %p43, %p44
    %s47 = sadd.s32 %s46, 1
    %p50 = scmp.eq.s32.totalorder %s17, 3
    %p51 = scmp.ne.s32.totalorder %s46, %s48
    %p52 = scmp.eq.s32.totalorder %s17, 0
    %p53 = por %p51, %p52
    %p54 = scmp.ne.s32.totalorder %s46, %s48
    %p55 = scmp.eq.s32.totalorder %s22, 3
    %p56 = por %p54, %p55
    %p57 = scmp.ne.s32.totalorder %s48, %s49
    %p58 = scmp.eq.s32.totalorder %s22, 0
    %p59 = por %p57, %p58
    %p60 = scmp.ne.s32.totalorder %s48, %s49
    %p61 = scmp.eq.s32.totalorder %s23, 3
    %p62 = por %p60, %p61
    %p64 = scmp.ne.s32.totalorder %s49, %s63
    %p65 = scmp.eq.s32.totalorder %s23, 0
    %p66 = por %p64, %p65
    %s68 = sadd.s32 %s67, 1
    %p71 = scmp.eq.s32.totalorder %s17, 3
    %p72 = scmp.ne.s32.totalorder %s67, %s69
    %p73 = scmp.eq.s32.totalorder %s17, 0
    %p74 = por %p72, %p73
    %p75 = scmp.ne.s32.totalorder %s67, %s69
    %p76 = scmp.eq.s32.totalorder %s22, 3
    %p77 = por %p75, %p76
    %p78 = scmp.ne.s32.totalorder %s69, %s70
    %p79 = scmp.eq.s32.totalorder %s22, 0
    %p80 = por %p78, %p79
    %p81 = scmp.ne.s32.totalorder %s69, %s70
    %p82 = scmp.eq.s32.totalorder %s23, 3
    %p83 = por %p81, %p82
    %p85 = scmp.ne.s32.totalorder %s70, %s84
    %p86 = scmp.eq.s32.totalorder %s23, 0
    %p87 = por %p85, %p86
    %s88 = ssub.s32 %s17, %s24
    %p89 = scmp.eq.s32.totalorder %s88, 0
    %s91 = sadd.s32 %s90, 1
    %s92 = scalar_select %p89, %s90, %s91
    %p95 = pneg %p89
    %p96 = scmp.eq.s32.totalorder %s17, 3
    %p97 = por %p95, %p96
    %p98 = scmp.ne.s32.totalorder %s90, %s93
    %p99 = scmp.eq.s32.totalorder %s17, 0
    %p100 = por %p98, %p99
    %p101 = scmp.ne.s32.totalorder %s90, %s93
    %p102 = scmp.eq.s32.totalorder %s22, 3
    %p103 = por %p101, %p102
    %p104 = scmp.ne.s32.totalorder %s93, %s94
    %p105 = scmp.eq.s32.totalorder %s22, 0
    %p106 = por %p104, %p105
    %p107 = scmp.ne.s32.totalorder %s93, %s94
    %p108 = scmp.eq.s32.totalorder %s23, 3
    %p109 = por %p107, %p108
    %p111 = scmp.ne.s32.totalorder %s94, %s110
    %p112 = scmp.eq.s32.totalorder %s23, 0
    %p113 = por %p111, %p112
    %s114 = ssub.s32 %s17, %s24
    %p115 = scmp.eq.s32.totalorder %s114, 0
    %s117 = sadd.s32 %s116, 1
    %s118 = scalar_select %p115, %s116, %s117
    %p121 = pneg %p115
    %p122 = scmp.eq.s32.totalorder %s17, 3
    %p123 = por %p121, %p122
    %p124 = scmp.ne.s32.totalorder %s116, %s119
    %p125 = scmp.eq.s32.totalorder %s17, 0
    %p126 = por %p124, %p125
    %p127 = scmp.ne.s32.totalorder %s116, %s119
    %p128 = scmp.eq.s32.totalorder %s22, 3
    %p129 = por %p127, %p128
    %p130 = scmp.ne.s32.totalorder %s119, %s120
    %p131 = scmp.eq.s32.totalorder %s22, 0
    %p132 = por %p130, %p131
    %p133 = scmp.ne.s32.totalorder %s119, %s120
    %p134 = scmp.eq.s32.totalorder %s23, 3
    %p135 = por %p133, %p134
    %p137 = scmp.ne.s32.totalorder %s120, %s136
    %p138 = scmp.eq.s32.totalorder %s23, 0
    %p139 = por %p137, %p138
    %s140 = ssub.s32 %s17, %s24
    %p141 = scmp.eq.s32.totalorder %s140, 0
    %s143 = sadd.s32 %s142, 1
    %s144 = scalar_select %p141, %s142, %s143
    %p147 = pneg %p141
    %p148 = scmp.eq.s32.totalorder %s17, 3
    %p149 = por %p147, %p148
    %p150 = scmp.ne.s32.totalorder %s142, %s145
    %p151 = scmp.eq.s32.totalorder %s17, 0
    %p152 = por %p150, %p151
    %p153 = scmp.ne.s32.totalorder %s142, %s145
    %p154 = scmp.eq.s32.totalorder %s22, 3
    %p155 = por %p153, %p154
    %p156 = scmp.ne.s32.totalorder %s145, %s146
    %p157 = scmp.eq.s32.totalorder %s22, 0
    %p158 = por %p156, %p157
    %p159 = scmp.ne.s32.totalorder %s145, %s146
    %p160 = scmp.eq.s32.totalorder %s23, 3
    %p161 = por %p159, %p160
    %p163 = scmp.ne.s32.totalorder %s146, %s162
    %p164 = scmp.eq.s32.totalorder %s23, 0
    %p165 = por %p163, %p164
    %s166 = ssub.s32 %s17, %s24
    %p167 = scmp.eq.s32.totalorder %s166, 0
    %s169 = sadd.s32 %s168, 1
    %s170 = scalar_select %p167, %s168, %s169
    %p173 = pneg %p167
    %p174 = scmp.eq.s32.totalorder %s17, 3
    %p175 = por %p173, %p174
    %p176 = scmp.ne.s32.totalorder %s168, %s171
    %p177 = scmp.eq.s32.totalorder %s17, 0
    %p178 = por %p176, %p177
    %p179 = scmp.ne.s32.totalorder %s168, %s171
    %p180 = scmp.eq.s32.totalorder %s22, 3
    %p181 = por %p179, %p180
    %p182 = scmp.ne.s32.totalorder %s171, %s172
    %p183 = scmp.eq.s32.totalorder %s22, 0
    %p184 = por %p182, %p183
    %p185 = scmp.ne.s32.totalorder %s171, %s172
    %p186 = scmp.eq.s32.totalorder %s23, 3
    %p187 = por %p185, %p186
    %p189 = scmp.ne.s32.totalorder %s172, %s188
    %p190 = scmp.eq.s32.totalorder %s23, 0
    %p191 = por %p189, %p190
    %s193 = sadd.s32 %s192, 1
    %p196 = scmp.eq.s32.totalorder %s17, 3
    %p197 = scmp.ne.s32.totalorder %s192, %s194
    %p198 = scmp.eq.s32.totalorder %s17, 0
    %p199 = por %p197, %p198
    %p200 = scmp.ne.s32.totalorder %s192, %s194
    %p201 = scmp.eq.s32.totalorder %s22, 3
    %p202 = por %p200, %p201
    %p203 = scmp.ne.s32.totalorder %s194, %s195
    %p204 = scmp.eq.s32.totalorder %s22, 0
    %p205 = por %p203, %p204
    %p206 = scmp.ne.s32.totalorder %s194, %s195
    %p207 = scmp.eq.s32.totalorder %s23, 3
    %p208 = por %p206, %p207
    %p210 = scmp.ne.s32.totalorder %s195, %s209
    %p211 = scmp.eq.s32.totalorder %s23, 0
    %p212 = por %p210, %p211
    %s214 = sadd.s32 %s213, 1
    %p217 = scmp.eq.s32.totalorder %s17, 3
    %p218 = scmp.ne.s32.totalorder %s213, %s215
    %p219 = scmp.eq.s32.totalorder %s17, 0
    %p220 = por %p218, %p219
    %p221 = scmp.ne.s32.totalorder %s213, %s215
    %p222 = scmp.eq.s32.totalorder %s22, 3
    %p223 = por %p221, %p222
    %p224 = scmp.ne.s32.totalorder %s215, %s216
    %p225 = scmp.eq.s32.totalorder %s22, 0
    %p226 = por %p224, %p225
    %p227 = scmp.ne.s32.totalorder %s215, %s216
    %p228 = scmp.eq.s32.totalorder %s23, 3
    %p229 = por %p227, %p228
    %p231 = scmp.ne.s32.totalorder %s216, %s230
    %p232 = scmp.eq.s32.totalorder %s23, 0
    %p233 = por %p231, %p232
    %s235 = sadd.s32 %s234, 1
    %p238 = scmp.eq.s32.totalorder %s17, 3
    %p239 = scmp.ne.s32.totalorder %s234, %s236
    %p240 = scmp.eq.s32.totalorder %s17, 0
    %p241 = por %p239, %p240
    %p242 = scmp.ne.s32.totalorder %s234, %s236
    %p243 = scmp.eq.s32.totalorder %s22, 3
    %p244 = por %p242, %p243
    %p245 = scmp.ne.s32.totalorder %s236, %s237
    %p246 = scmp.eq.s32.totalorder %s22, 0
    %p247 = por %p245, %p246
    %p248 = scmp.ne.s32.totalorder %s236, %s237
    %p249 = scmp.eq.s32.totalorder %s23, 3
    %p250 = por %p248, %p249
    %p252 = scmp.ne.s32.totalorder %s237, %s251
    %p253 = scmp.eq.s32.totalorder %s23, 0
    %p254 = por %p252, %p253
    %s256 = sadd.s32 %s255, 1
    %p259 = scmp.eq.s32.totalorder %s17, 3
    %p260 = scmp.ne.s32.totalorder %s255, %s257
    %p261 = scmp.eq.s32.totalorder %s17, 0
    %p262 = por %p260, %p261
    %p263 = scmp.ne.s32.totalorder %s255, %s257
    %p264 = scmp.eq.s32.totalorder %s22, 3
    %p265 = por %p263, %p264
    %p266 = scmp.ne.s32.totalorder %s257, %s258
    %p267 = scmp.eq.s32.totalorder %s22, 0
    %p268 = por %p266, %p267
    %p269 = scmp.ne.s32.totalorder %s257, %s258
    %p270 = scmp.eq.s32.totalorder %s23, 3
    %p271 = por %p269, %p270
    %p273 = scmp.ne.s32.totalorder %s258, %s272
    %p274 = scmp.eq.s32.totalorder %s23, 0
    %p275 = por %p273, %p274
    %s277 = sadd.s32 %s276, 1
    %p280 = scmp.eq.s32.totalorder %s17, 3
    %p281 = scmp.ne.s32.totalorder %s276, %s278
    %p282 = scmp.eq.s32.totalorder %s17, 0
    %p283 = por %p281, %p282
    %p284 = scmp.ne.s32.totalorder %s276, %s278
    %p285 = scmp.eq.s32.totalorder %s22, 3
    %p286 = por %p284, %p285
    %p287 = scmp.ne.s32.totalorder %s278, %s279
    %p288 = scmp.eq.s32.totalorder %s22, 0
    %p289 = por %p287, %p288
    %p290 = scmp.ne.s32.totalorder %s278, %s279
    %p291 = scmp.eq.s32.totalorder %s23, 3
    %p292 = por %p290, %p291
    %p294 = scmp.ne.s32.totalorder %s279, %s293
    %p295 = scmp.eq.s32.totalorder %s23, 0
    %p296 = por %p294, %p295
    %p297 = scmp.le.s32.totalorder 1, %s17
    %p298 = scmp.lt.s32.totalorder %s17, 5
    %p299 = pnand %p297, %p298
    %p300 = pneg %p299
    // Predicated region
    $region9: #{dropgin_forward.1} parent=5 // pred_check
      _
    $region10: #{dropgin_forward.1} parent=5 // pred_check_branch
      %302 = sbr.rel (%p299) target = $region12
    $region11: #{dropgin_forward.1} parent=5 // pred_region
      %s303 = ssub.s32 %s17, 1
      // Predicated region
      $region13: #{dropgin_forward.1} parent=11 // pred_check
        %p304 = pneg %p38
      $region14: #{dropgin_forward.1} parent=11 // pred_check_branch
        %306 = sbr.rel (%p304) target = $region16
      $region15: #{dropgin_forward.1} parent=11 // pred_region
        _
      $region16: #{dropgin_forward.1} parent=11 // pred_fallthru
        _
      // Predicated region
      $region17: #{dropgin_forward.1} parent=11 // pred_check
        %p307 = pneg %p59
      $region18: #{dropgin_forward.1} parent=11 // pred_check_branch
        %309 = sbr.rel (%p307) target = $region20
      $region19: #{dropgin_forward.1} parent=11 // pred_region
        _
      $region20: #{dropgin_forward.1} parent=11 // pred_fallthru
        _
      // Predicated region
      $region21: #{dropgin_forward.1} parent=11 // pred_check
        %p310 = pneg %p80
      $region22: #{dropgin_forward.1} parent=11 // pred_check_branch
        %312 = sbr.rel (%p310) target = $region24
      $region23: #{dropgin_forward.1} parent=11 // pred_region
        _
      $region24: #{dropgin_forward.1} parent=11 // pred_fallthru
        _
      // Predicated region
      $region25: #{dropgin_forward.1} parent=11 // pred_check
        %p313 = pneg %p205
      $region26: #{dropgin_forward.1} parent=11 // pred_check_branch
        %315 = sbr.rel (%p313) target = $region28
      $region27: #{dropgin_forward.1} parent=11 // pred_region
        _
      $region28: #{dropgin_forward.1} parent=11 // pred_fallthru
        _
      // Predicated region
      $region29: #{dropgin_forward.1} parent=11 // pred_check
        %p316 = pneg %p226
      $region30: #{dropgin_forward.1} parent=11 // pred_check_branch
        %318 = sbr.rel (%p316) target = $region32
      $region31: #{dropgin_forward.1} parent=11 // pred_region
        _
      $region32: #{dropgin_forward.1} parent=11 // pred_fallthru
        _
      // Predicated region
      $region33: #{dropgin_forward.1} parent=11 // pred_check
        %p319 = pneg %p247
      $region34: #{dropgin_forward.1} parent=11 // pred_check_branch
        %321 = sbr.rel (%p319) target = $region36
      $region35: #{dropgin_forward.1} parent=11 // pred_region
        _
      $region36: #{dropgin_forward.1} parent=11 // pred_fallthru
        _
      // Predicated region
      $region37: #{dropgin_forward.1} parent=11 // pred_check
        %p322 = pneg %p268
      $region38: #{dropgin_forward.1} parent=11 // pred_check_branch
        %324 = sbr.rel (%p322) target = $region40
      $region39: #{dropgin_forward.1} parent=11 // pred_region
        _
      $region40: #{dropgin_forward.1} parent=11 // pred_fallthru
        _
    $region12: #{dropgin_forward.1} parent=5 // pred_fallthru
      _
    %p325 = scmp.lt.s32.totalorder %s17, 4
    // Predicated region
    $region41: #{dropgin_forward.1} parent=5 // pred_check
      %p326 = pneg %p325
    $region42: #{dropgin_forward.1} parent=5 // pred_check_branch
      %328 = sbr.rel (%p326) target = $region44
    $region43: #{dropgin_forward.1} parent=5 // pred_region
      // Predicated region
      $region45: #{dropgin_forward.1} parent=43 // pred_check
        %p329 = pneg %p100
      $region46: #{dropgin_forward.1} parent=43 // pred_check_branch
        %331 = sbr.rel (%p329) target = $region48
      $region47: #{dropgin_forward.1} parent=43 // pred_region
        %p332 = scmp.lt.s32.totalorder %s17, 3
        %s333 = scalar_select %p332, %s17, 3
        %s334 = smul.addr %s333, 16
        %s335 = smul.addr %s334, 4
        %s336 = scalar_lea.vmem %s3, %s335
      $region48: #{dropgin_forward.1} parent=43 // pred_fallthru
        _
      // Predicated region
      $region49: #{dropgin_forward.1} parent=43 // pred_check
        %p337 = pneg %p126
      $region50: #{dropgin_forward.1} parent=43 // pred_check_branch
        %339 = sbr.rel (%p337) target = $region52
      $region51: #{dropgin_forward.1} parent=43 // pred_region
        %p340 = scmp.lt.s32.totalorder %s17, 3
        %s341 = scalar_select %p340, %s17, 3
        %s342 = scalar_lea.vmem %s4, %s341
      $region52: #{dropgin_forward.1} parent=43 // pred_fallthru
        _
      // Predicated region
      $region53: #{dropgin_forward.1} parent=43 // pred_check
        %p343 = pneg %p152
      $region54: #{dropgin_forward.1} parent=43 // pred_check_branch
        %345 = sbr.rel (%p343) target = $region56
      $region55: #{dropgin_forward.1} parent=43 // pred_region
        %p346 = scmp.lt.s32.totalorder %s17, 3
        %s347 = scalar_select %p346, %s17, 3
        %s348 = smul.addr %s347, 16
        %s349 = smul.addr %s348, 4
        %s350 = scalar_lea.vmem %s5, %s349
      $region56: #{dropgin_forward.1} parent=43 // pred_fallthru
        _
      // Predicated region
      $region57: #{dropgin_forward.1} parent=43 // pred_check
        %p351 = pneg %p178
      $region58: #{dropgin_forward.1} parent=43 // pred_check_branch
        %353 = sbr.rel (%p351) target = $region60
      $region59: #{dropgin_forward.1} parent=43 // pred_region
        %p354 = scmp.lt.s32.totalorder %s17, 3
        %s355 = scalar_select %p354, %s17, 3
        %s356 = scalar_lea.vmem %s6, %s355
      $region60: #{dropgin_forward.1} parent=43 // pred_fallthru
        _
    $region44: #{dropgin_forward.1} parent=5 // pred_fallthru
      _
    %p357 = scmp.le.s32.totalorder 1, %s17
    %p358 = scmp.lt.s32.totalorder %s17, 5
    %p359 = pnand %p357, %p358
    %p360 = pneg %p359
    // Predicated region
    $region61: #{dropgin_forward.1} parent=5 // pred_check
      _
    $region62: #{dropgin_forward.1} parent=5 // pred_check_branch
      %362 = sbr.rel (%p359) target = $region64
    $region63: #{dropgin_forward.1} parent=5 // pred_region
      %s363 = ssub.s32 %s17, 1
      %p364 = pneg %p38
      %p365 = pneg %p35
      %p366 = pneg %p59
      %p367 = pneg %p56
      %p368 = pneg %p80
      %p369 = pneg %p77
      %p370 = scmp.lt.s32.totalorder %s22, 3
      %s371 = scalar_select %p370, %s22, 3
      %s372 = smul.addr %s371, 16
      %s373 = smul.addr %s372, 4
      %s374 = scalar_lea.vmem %s3, %s373
      %p375 = pneg %p106
      %p376 = pneg %p103
      %p377 = scmp.lt.s32.totalorder %s22, 3
      %s378 = scalar_select %p377, %s22, 3
      %s379 = scalar_lea.vmem %s4, %s378
      %p380 = pneg %p132
      %p381 = pneg %p129
      %p382 = scmp.lt.s32.totalorder %s22, 3
      %s383 = scalar_select %p382, %s22, 3
      %s384 = smul.addr %s383, 16
      %s385 = smul.addr %s384, 4
      %s386 = scalar_lea.vmem %s5, %s385
      %p387 = pneg %p158
      %p388 = pneg %p155
      %p389 = scmp.lt.s32.totalorder %s22, 3
      %s390 = scalar_select %p389, %s22, 3
      %s391 = scalar_lea.vmem %s6, %s390
      %p392 = pneg %p184
      %p393 = pneg %p181
      %p394 = pneg %p205
      %p395 = pneg %p202
      %p396 = pneg %p226
      %p397 = pneg %p223
      %p398 = pneg %p247
      %p399 = pneg %p244
      %p400 = pneg %p268
      %p401 = pneg %p265
      %p402 = pneg %p289
      %p403 = pneg %p286
      %p404 = scmp.lt.s32.totalorder %s22, 3
      %s405 = scalar_select %p404, %s22, 3
      %s406 = smul.addr %s405, 16
      %s407 = smul.addr %s406, 4
      %s408 = scalar_lea.vmem %s3, %s407
      %p409 = scmp.lt.s32.totalorder %s22, 3
      %s410 = scalar_select %p409, %s22, 3
      %s411 = scalar_lea.vmem %s4, %s410
      %p412 = scmp.lt.s32.totalorder %s22, 3
      %s413 = scalar_select %p412, %s22, 3
      %s414 = smul.addr %s413, 16
      %s415 = smul.addr %s414, 4
      %s416 = scalar_lea.vmem %s5, %s415
      %p417 = scmp.lt.s32.totalorder %s22, 3
      %s418 = scalar_select %p417, %s22, 3
      %s419 = scalar_lea.vmem %s6, %s418
      %p421 = scmp.eq.s32.totalorder %s22, 0
      // Predicated region
      $region65: #{dropgin_forward.1} parent=63 // pred_check
        %p422 = pneg %p421
      $region66: #{dropgin_forward.1} parent=63 // pred_check_branch
        %424 = sbr.rel (%p422) target = $region68
      $region67: #{dropgin_forward.1} parent=63 // pred_region
        %v425 = vld [vmem:[%s1] sm:$0xf]
        %v426 = vld [vmem:[%s1 + $0x4] sm:$0xf]
        %v427 = vunpack.c.l.bf16 %v425
        %v428 = vunpack.c.l.bf16 %v426
        %v429 = vld [vmem:[%s2] sm:$0xff]
        %v430 = vld [vmem:[%s2 + $0x8] sm:$0xff]
        %432 = vset.pattern.permute.xlu0 0
        %433 = vperm.xlu0 %432, %v429
        %v434 = vpop.permute.xlu0 %433
        %437 = vset.pattern.permute.xlu0 0
        %438 = vperm.xlu0 %437, %v430
        %v439 = vpop.permute.xlu0 %438
        %v441 = vmul.f32 %v427, %v434
        %v442 = vmul.f32 %v428, %v439
        %443 = vst [vmem:[#allocation2] sm:$0xff] %v441
        %444 = vst [vmem:[#allocation2 + $0x8] sm:$0xff] %v442
        %s445 = scalar_lea.vmem %s2, 16
        %v446 = vld [vmem:[%s445] sm:$0xff]
        %v447 = vld [vmem:[%s445 + $0x8] sm:$0xff]
        %449 = vset.pattern.permute.xlu0 0
        %450 = vperm.xlu0 %449, %v446
        %v451 = vpop.permute.xlu0 %450
        %454 = vset.pattern.permute.xlu0 0
        %455 = vperm.xlu0 %454, %v447
        %v456 = vpop.permute.xlu0 %455
        %v458 = vmul.f32 %v427, %v451
        %v459 = vmul.f32 %v428, %v456
        %460 = vst [vmem:[#allocation2 + $0x10] sm:$0xff] %v458
        %461 = vst [vmem:[#allocation2 + $0x18] sm:$0xff] %v459
        %s462 = scalar_lea.vmem %s2, 32
        %v463 = vld [vmem:[%s462] sm:$0xff]
        %v464 = vld [vmem:[%s462 + $0x8] sm:$0xff]
        %466 = vset.pattern.permute.xlu0 0
        %467 = vperm.xlu0 %466, %v463
        %v468 = vpop.permute.xlu0 %467
        %471 = vset.pattern.permute.xlu0 0
        %472 = vperm.xlu0 %471, %v464
        %v473 = vpop.permute.xlu0 %472
        %v475 = vmul.f32 %v427, %v468
        %v476 = vmul.f32 %v428, %v473
        %477 = vst [vmem:[#allocation2 + $0x20] sm:$0xff] %v475
        %478 = vst [vmem:[#allocation2 + $0x28] sm:$0xff] %v476
        %s479 = scalar_lea.vmem %s2, 48
        %v480 = vld [vmem:[%s479] sm:$0xff]
        %v481 = vld [vmem:[%s479 + $0x8] sm:$0xff]
        %483 = vset.pattern.permute.xlu0 0
        %484 = vperm.xlu0 %483, %v480
        %v485 = vpop.permute.xlu0 %484
        %488 = vset.pattern.permute.xlu0 0
        %489 = vperm.xlu0 %488, %v481
        %v490 = vpop.permute.xlu0 %489
        %v492 = vmul.f32 %v427, %v485
        %v493 = vmul.f32 %v428, %v490
        %494 = vst [vmem:[#allocation2 + $0x30] sm:$0xff] %v492
        %495 = vst [vmem:[#allocation2 + $0x38] sm:$0xff] %v493
        %v496 = vld [vmem:[%s7] sm:$0xf]
        %v497 = vld [vmem:[#allocation2] sm:$0xff]
        %v498 = vld [vmem:[#allocation2 + $0x8] sm:$0xff]
        %v499 = vld [vmem:[#allocation2 + $0x10] sm:$0xff]
        %v500 = vld [vmem:[#allocation2 + $0x18] sm:$0xff]
        %v501 = vld [vmem:[#allocation2 + $0x20] sm:$0xff]
        %v502 = vld [vmem:[#allocation2 + $0x28] sm:$0xff]
        %v503 = vld [vmem:[#allocation2 + $0x30] sm:$0xff]
        %v504 = vld [vmem:[#allocation2 + $0x38] sm:$0xff]
        %v505 = vpack.c.bf16 %v498, %v497
        %v506 = vpack.c.bf16 %v500, %v499
        %v507 = vpack.c.bf16 %v502, %v501
        %v508 = vpack.c.bf16 %v504, %v503
        %vm509 = vcmask 523264
        %v511 = vsel %vm509, %v496, 0
        %513 = vmatpush.bf16.msra.mxu0 0
        %514 = vmatpush.bf16.msra.mxu0 0
        %515 = vmatpush.bf16.msra.mxu0 0
        %516 = vmatpush.bf16.msra.mxu0 0
        %517 = vmatpush.bf16.msra.mxu0 %v508
        %518 = vmatpush.bf16.msra.mxu0 %v507
        %519 = vmatpush.bf16.msra.mxu0 %v506
        %520 = vmatpush.bf16.msra.mxu0 %v505
        %521 = vmatmul.bf16.gmra.mxu0 %v511
        %v522 = vpop.f32.mrf.mxu0
        %v523 = vadd.f32 0.0, %v522
        %v524 = vpop.f32.mrf.mxu0
        %525 = vdwg.mxu0
        %526 = vst [vmem:[#allocation3] sm:$0xff] %v523
      $region68: #{dropgin_forward.1} parent=63 // pred_fallthru
        _
      %v527 = vld [vmem:[#allocation2] sm:$0xff]
      %v528 = vld [vmem:[#allocation2 + $0x8] sm:$0xff]
      %v529 = vpack.c.bf16 %v528, %v527
      %v530 = vld [vmem:[%s0] sm:$0xf]
      %v531 = vld [vmem:[%s0 + $0x4] sm:$0xf]
      %v534 = vunpack.c.l.b16 %v530
      %v535 = vunpack.c.l.b16 %v531
      %v536 = vpack.c.b16 %v535, %v534
      %vm537 = vcmask 130048
      %v539 = vsel %vm537, %v536, 0
      %541 = vmatpush.bf16.msra.mxu0 0
      %542 = vmatpush.bf16.msra.mxu0 0
      %543 = vmatpush.bf16.msra.mxu0 0
      %544 = vmatpush.bf16.msra.mxu0 0
      %545 = vmatpush.bf16.msra.mxu0 0
      %546 = vmatpush.bf16.msra.mxu0 0
      %547 = vmatpush.bf16.msra.mxu0 0
      %548 = vmatpush.bf16.msra.mxu0 %v529
      %549 = vmatmul.bf16.gmra.mxu0 %v539
      %v550 = vpop.f32.mrf.mxu0
      %v551 = vadd.f32 0.0, %v550
      %v552 = vpop.f32.mrf.mxu0
      %v553 = vadd.f32 0.0, %v552
      %554 = vdwg.mxu0
      %555 = vst [vmem:[#allocation2] sm:$0xff] %v551
      %556 = vst [vmem:[#allocation2 + $0x8] sm:$0xff] %v553
      %v557 = vld [vmem:[#allocation2 + $0x10] sm:$0xff]
      %v558 = vld [vmem:[#allocation2 + $0x18] sm:$0xff]
      %v559 = vpack.c.bf16 %v558, %v557
      %v560 = vld [vmem:[%s0] sm:$0xf]
      %v561 = vld [vmem:[%s0 + $0x4] sm:$0xf]
      %v564 = vunpack.c.l.b16 %v560
      %v565 = vunpack.c.l.b16 %v561
      %v566 = vpack.c.b16 %v565, %v564
      %v568 = vsel %vm537, %v566, 0
      %570 = vmatpush.bf16.msra.mxu0 0
      %571 = vmatpush.bf16.msra.mxu0 0
      %572 = vmatpush.bf16.msra.mxu0 0
      %573 = vmatpush.bf16.msra.mxu0 0
      %574 = vmatpush.bf16.msra.mxu0 0
      %575 = vmatpush.bf16.msra.mxu0 0
      %576 = vmatpush.bf16.msra.mxu0 0
      %577 = vmatpush.bf16.msra.mxu0 %v559
      %578 = vmatmul.bf16.gmra.mxu0 %v568
      %v579 = vpop.f32.mrf.mxu0
      %v580 = vadd.f32 0.0, %v579
      %v581 = vpop.f32.mrf.mxu0
      %v582 = vadd.f32 0.0, %v581
      %583 = vdwg.mxu0
      %584 = vst [vmem:[#allocation2 + $0x10] sm:$0xff] %v580
      %585 = vst [vmem:[#allocation2 + $0x18] sm:$0xff] %v582
      %v586 = vld [vmem:[#allocation2 + $0x20] sm:$0xff]
      %v587 = vld [vmem:[#allocation2 + $0x28] sm:$0xff]
      %v588 = vpack.c.bf16 %v587, %v586
      %v589 = vld [vmem:[%s0] sm:$0xf]
      %v590 = vld [vmem:[%s0 + $0x4] sm:$0xf]
      %v593 = vunpack.c.l.b16 %v589
      %v594 = vunpack.c.l.b16 %v590
      %v595 = vpack.c.b16 %v594, %v593
      %v597 = vsel %vm537, %v595, 0
      %599 = vmatpush.bf16.msra.mxu0 0
      %600 = vmatpush.bf16.msra.mxu0 0
      %601 = vmatpush.bf16.msra.mxu0 0
      %602 = vmatpush.bf16.msra.mxu0 0
      %603 = vmatpush.bf16.msra.mxu0 0
      %604 = vmatpush.bf16.msra.mxu0 0
      %605 = vmatpush.bf16.msra.mxu0 0
      %606 = vmatpush.bf16.msra.mxu0 %v588
      %607 = vmatmul.bf16.gmra.mxu0 %v597
      %v608 = vpop.f32.mrf.mxu0
      %v609 = vadd.f32 0.0, %v608
      %v610 = vpop.f32.mrf.mxu0
      %v611 = vadd.f32 0.0, %v610
      %612 = vdwg.mxu0
      %613 = vst [vmem:[#allocation2 + $0x20] sm:$0xff] %v609
      %614 = vst [vmem:[#allocation2 + $0x28] sm:$0xff] %v611
      %v615 = vld [vmem:[#allocation2 + $0x30] sm:$0xff]
      %v616 = vld [vmem:[#allocation2 + $0x38] sm:$0xff]
      %v617 = vpack.c.bf16 %v616, %v615
      %v618 = vld [vmem:[%s0] sm:$0xf]
      %v619 = vld [vmem:[%s0 + $0x4] sm:$0xf]
      %v622 = vunpack.c.l.b16 %v618
      %v623 = vunpack.c.l.b16 %v619
      %v624 = vpack.c.b16 %v623, %v622
      %v626 = vsel %vm537, %v624, 0
      %628 = vmatpush.bf16.msra.mxu0 0
      %629 = vmatpush.bf16.msra.mxu0 0
      %630 = vmatpush.bf16.msra.mxu0 0
      %631 = vmatpush.bf16.msra.mxu0 0
      %632 = vmatpush.bf16.msra.mxu0 0
      %633 = vmatpush.bf16.msra.mxu0 0
      %634 = vmatpush.bf16.msra.mxu0 0
      %635 = vmatpush.bf16.msra.mxu0 %v617
      %636 = vmatmul.bf16.gmra.mxu0 %v626
      %v637 = vpop.f32.mrf.mxu0
      %v638 = vadd.f32 0.0, %v637
      %v639 = vpop.f32.mrf.mxu0
      %v640 = vadd.f32 0.0, %v639
      %641 = vdwg.mxu0
      %642 = vst [vmem:[#allocation2 + $0x30] sm:$0xff] %v638
      %643 = vst [vmem:[#allocation2 + $0x38] sm:$0xff] %v640
      %v644 = vld [vmem:[#allocation2] sm:$0xff]
      %v645 = vld [vmem:[#allocation2 + $0x8] sm:$0xff]
      %v646 = vld [vmem:[#allocation2 + $0x10] sm:$0xff]
      %v647 = vld [vmem:[#allocation2 + $0x18] sm:$0xff]
      %v648 = vld [vmem:[#allocation2 + $0x20] sm:$0xff]
      %v649 = vld [vmem:[#allocation2 + $0x28] sm:$0xff]
      %v650 = vld [vmem:[#allocation2 + $0x30] sm:$0xff]
      %v651 = vld [vmem:[#allocation2 + $0x38] sm:$0xff]
      %v652 = vpack.c.bf16 %v645, %v644
      %v653 = vpack.c.bf16 %v647, %v646
      %v654 = vpack.c.bf16 %v649, %v648
      %v655 = vpack.c.bf16 %v651, %v650
      %v656 = vld [vmem:[%s408] sm:$0xf]
      %v657 = vld [vmem:[%s408 + $0x4] sm:$0xf]
      %v658 = vld [vmem:[%s408 + $0x8] sm:$0xf]
      %v659 = vld [vmem:[%s408 + $0xc] sm:$0xf]
      %v660 = vld [vmem:[%s408 + $0x10] sm:$0xf]
      %v661 = vld [vmem:[%s408 + $0x14] sm:$0xf]
      %v662 = vld [vmem:[%s408 + $0x18] sm:$0xf]
      %v663 = vld [vmem:[%s408 + $0x1c] sm:$0xf]
      %v664 = vld [vmem:[%s408 + $0x20] sm:$0xf]
      %v665 = vld [vmem:[%s408 + $0x24] sm:$0xf]
      %v666 = vld [vmem:[%s408 + $0x28] sm:$0xf]
      %v667 = vld [vmem:[%s408 + $0x2c] sm:$0xf]
      %v668 = vld [vmem:[%s408 + $0x30] sm:$0xf]
      %v669 = vld [vmem:[%s408 + $0x34] sm:$0xf]
      %v670 = vld [vmem:[%s408 + $0x38] sm:$0xf]
      %v671 = vld [vmem:[%s408 + $0x3c] sm:$0xf]
      %v672 = vld [vmem:[%s411] sm:$0x1]
      %v674 = vperm.slane %v672, 0
      %v692 = vunpack.c.l.b16 %v656
      %v693 = vunpack.c.l.b16 %v657
      %v694 = vunpack.c.l.b16 %v658
      %v695 = vunpack.c.l.b16 %v659
      %v696 = vunpack.c.l.b16 %v660
      %v697 = vunpack.c.l.b16 %v661
      %v698 = vunpack.c.l.b16 %v662
      %v699 = vunpack.c.l.b16 %v663
      %v700 = vunpack.c.l.b16 %v664
      %v701 = vunpack.c.l.b16 %v665
      %v702 = vunpack.c.l.b16 %v666
      %v703 = vunpack.c.l.b16 %v667
      %v704 = vunpack.c.l.b16 %v668
      %v705 = vunpack.c.l.b16 %v669
      %v706 = vunpack.c.l.b16 %v670
      %v707 = vunpack.c.l.b16 %v671
      %v708 = vpack.c.b16 %v693, %v692
      %v709 = vpack.c.b16 %v695, %v694
      %v710 = vpack.c.b16 %v697, %v696
      %v711 = vpack.c.b16 %v699, %v698
      %v712 = vpack.c.b16 %v701, %v700
      %v713 = vpack.c.b16 %v703, %v702
      %v714 = vpack.c.b16 %v705, %v704
      %v715 = vpack.c.b16 %v707, %v706
      %724 = vmatpush.bf16.msra.mxu0 %v715
      %725 = vmatpush.bf16.msra.mxu0 %v714
      %726 = vmatpush.bf16.msra.mxu0 %v713
      %727 = vmatpush.bf16.msra.mxu0 %v712
      %728 = vmatpush.bf16.msra.mxu0 %v711
      %729 = vmatpush.bf16.msra.mxu0 %v710
      %730 = vmatpush.bf16.msra.mxu0 %v709
      %731 = vmatpush.bf16.msra.mxu0 %v708
      %732 = vmatmul.bf16.gmra.mxu0 %v652
      %v733 = vpop.f32.mrf.mxu0
      %v734 = vadd.f32 %v674, %v733
      %v735 = vpop.f32.mrf.mxu0
      %v736 = vadd.f32 %v674, %v735
      %737 = vmatmul.bf16.gmra.mxu0 %v653
      %v738 = vpop.f32.mrf.mxu0
      %v739 = vadd.f32 %v674, %v738
      %v740 = vpop.f32.mrf.mxu0
      %v741 = vadd.f32 %v674, %v740
      %742 = vmatmul.bf16.gmra.mxu0 %v654
      %v743 = vpop.f32.mrf.mxu0
      %v744 = vadd.f32 %v674, %v743
      %v745 = vpop.f32.mrf.mxu0
      %v746 = vadd.f32 %v674, %v745
      %747 = vmatmul.bf16.gmra.mxu0 %v655
      %v748 = vpop.f32.mrf.mxu0
      %v749 = vadd.f32 %v674, %v748
      %v750 = vpop.f32.mrf.mxu0
      %v751 = vadd.f32 %v674, %v750
      %752 = vdwg.mxu0
      %v753 = vmax.f32 %v734, 0.0
      %v754 = vmax.f32 %v736, 0.0
      %v755 = vmax.f32 %v739, 0.0
      %v756 = vmax.f32 %v741, 0.0
      %v757 = vmax.f32 %v744, 0.0
      %v758 = vmax.f32 %v746, 0.0
      %v759 = vmax.f32 %v749, 0.0
      %v760 = vmax.f32 %v751, 0.0
      %v761 = vpack.c.bf16 %v754, %v753
      %v762 = vpack.c.bf16 %v756, %v755
      %v763 = vpack.c.bf16 %v758, %v757
      %v764 = vpack.c.bf16 %v760, %v759
      %v765 = vld [vmem:[%s416] sm:$0xf]
      %v766 = vld [vmem:[%s416 + $0x4] sm:$0xf]
      %v767 = vld [vmem:[%s416 + $0x8] sm:$0xf]
      %v768 = vld [vmem:[%s416 + $0xc] sm:$0xf]
      %v769 = vld [vmem:[%s416 + $0x10] sm:$0xf]
      %v770 = vld [vmem:[%s416 + $0x14] sm:$0xf]
      %v771 = vld [vmem:[%s416 + $0x18] sm:$0xf]
      %v772 = vld [vmem:[%s416 + $0x1c] sm:$0xf]
      %v773 = vld [vmem:[%s416 + $0x20] sm:$0xf]
      %v774 = vld [vmem:[%s416 + $0x24] sm:$0xf]
      %v775 = vld [vmem:[%s416 + $0x28] sm:$0xf]
      %v776 = vld [vmem:[%s416 + $0x2c] sm:$0xf]
      %v777 = vld [vmem:[%s416 + $0x30] sm:$0xf]
      %v778 = vld [vmem:[%s416 + $0x34] sm:$0xf]
      %v779 = vld [vmem:[%s416 + $0x38] sm:$0xf]
      %v780 = vld [vmem:[%s416 + $0x3c] sm:$0xf]
      %v781 = vld [vmem:[%s419] sm:$0x1]
      %v783 = vperm.slane %v781, 0
      %v801 = vunpack.c.l.b16 %v765
      %v802 = vunpack.c.l.b16 %v766
      %v803 = vunpack.c.l.b16 %v767
      %v804 = vunpack.c.l.b16 %v768
      %v805 = vunpack.c.l.b16 %v769
      %v806 = vunpack.c.l.b16 %v770
      %v807 = vunpack.c.l.b16 %v771
      %v808 = vunpack.c.l.b16 %v772
      %v809 = vunpack.c.l.b16 %v773
      %v810 = vunpack.c.l.b16 %v774
      %v811 = vunpack.c.l.b16 %v775
      %v812 = vunpack.c.l.b16 %v776
      %v813 = vunpack.c.l.b16 %v777
      %v814 = vunpack.c.l.b16 %v778
      %v815 = vunpack.c.l.b16 %v779
      %v816 = vunpack.c.l.b16 %v780
      %v817 = vpack.c.b16 %v802, %v801
      %v818 = vpack.c.b16 %v804, %v803
      %v819 = vpack.c.b16 %v806, %v805
      %v820 = vpack.c.b16 %v808, %v807
      %v821 = vpack.c.b16 %v810, %v809
      %v822 = vpack.c.b16 %v812, %v811
      %v823 = vpack.c.b16 %v814, %v813
      %v824 = vpack.c.b16 %v816, %v815
      %833 = vmatpush.bf16.msra.mxu0 %v824
      %834 = vmatpush.bf16.msra.mxu0 %v823
      %835 = vmatpush.bf16.msra.mxu0 %v822
      %836 = vmatpush.bf16.msra.mxu0 %v821
      %837 = vmatpush.bf16.msra.mxu0 %v820
      %838 = vmatpush.bf16.msra.mxu0 %v819
      %839 = vmatpush.bf16.msra.mxu0 %v818
      %840 = vmatpush.bf16.msra.mxu0 %v817
      %841 = vmatmul.bf16.gmra.mxu0 %v761
      %v842 = vpop.f32.mrf.mxu0
      %v843 = vadd.f32 %v783, %v842
      %v844 = vpop.f32.mrf.mxu0
      %v845 = vadd.f32 %v783, %v844
      %846 = vmatmul.bf16.gmra.mxu0 %v762
      %v847 = vpop.f32.mrf.mxu0
      %v848 = vadd.f32 %v783, %v847
      %v849 = vpop.f32.mrf.mxu0
      %v850 = vadd.f32 %v783, %v849
      %851 = vmatmul.bf16.gmra.mxu0 %v763
      %v852 = vpop.f32.mrf.mxu0
      %v853 = vadd.f32 %v783, %v852
      %v854 = vpop.f32.mrf.mxu0
      %v855 = vadd.f32 %v783, %v854
      %856 = vmatmul.bf16.gmra.mxu0 %v764
      %v857 = vpop.f32.mrf.mxu0
      %v858 = vadd.f32 %v783, %v857
      %v859 = vpop.f32.mrf.mxu0
      %v860 = vadd.f32 %v783, %v859
      %861 = vdwg.mxu0
      %v862 = vmax.f32 %v843, 0.0
      %v863 = vmax.f32 %v845, 0.0
      %v864 = vmax.f32 %v848, 0.0
      %v865 = vmax.f32 %v850, 0.0
      %v866 = vmax.f32 %v853, 0.0
      %v867 = vmax.f32 %v855, 0.0
      %v868 = vmax.f32 %v858, 0.0
      %v869 = vmax.f32 %v860, 0.0
      %870 = vst [vmem:[#allocation2] sm:$0xff] %v862
      %871 = vst [vmem:[#allocation2 + $0x8] sm:$0xff] %v863
      %872 = vst [vmem:[#allocation2 + $0x10] sm:$0xff] %v864
      %873 = vst [vmem:[#allocation2 + $0x18] sm:$0xff] %v865
      %874 = vst [vmem:[#allocation2 + $0x20] sm:$0xff] %v866
      %875 = vst [vmem:[#allocation2 + $0x28] sm:$0xff] %v867
      %876 = vst [vmem:[#allocation2 + $0x30] sm:$0xff] %v868
      %877 = vst [vmem:[#allocation2 + $0x38] sm:$0xff] %v869
      %v878 = vld [vmem:[%s7] sm:$0xf]
      %v879 = vpack.c.bf16 %v863, %v862
      %v880 = vpack.c.bf16 %v865, %v864
      %v881 = vpack.c.bf16 %v867, %v866
      %v882 = vpack.c.bf16 %v869, %v868
      %vm883 = vcmask 523264
      %v885 = vsel %vm883, %v878, 0
      %887 = vmatpush.bf16.msra.mxu0 0
      %888 = vmatpush.bf16.msra.mxu0 0
      %889 = vmatpush.bf16.msra.mxu0 0
      %890 = vmatpush.bf16.msra.mxu0 0
      %891 = vmatpush.bf16.msra.mxu0 %v882
      %892 = vmatpush.bf16.msra.mxu0 %v881
      %893 = vmatpush.bf16.msra.mxu0 %v880
      %894 = vmatpush.bf16.msra.mxu0 %v879
      %895 = vmatmul.bf16.gmra.mxu0 %v885
      %v896 = vpop.f32.mrf.mxu0
      %v897 = vadd.f32 0.0, %v896
      %v898 = vpop.f32.mrf.mxu0
      %899 = vdwg.mxu0
      // Predicated region
      $region69: #{dropgin_forward.1} parent=63 // pred_check
        %p900 = pneg %p421
      $region70: #{dropgin_forward.1} parent=63 // pred_check_branch
        %902 = sbr.rel (%p900) target = $region72
      $region71: #{dropgin_forward.1} parent=63 // pred_region
        %903 = vst [vmem:[#allocation3 + $0x8] sm:$0xff] %v897
      $region72: #{dropgin_forward.1} parent=63 // pred_fallthru
        _
      %p904 = scmp.eq.s32.totalorder %s22, 1
      // Predicated region
      $region73: #{dropgin_forward.1} parent=63 // pred_check
        %p905 = pneg %p904
      $region74: #{dropgin_forward.1} parent=63 // pred_check_branch
        %907 = sbr.rel (%p905) target = $region76
      $region75: #{dropgin_forward.1} parent=63 // pred_region
        %908 = vst [vmem:[#allocation3 + $0x10] sm:$0xff] %v897
      $region76: #{dropgin_forward.1} parent=63 // pred_fallthru
        _
      %p909 = scmp.eq.s32.totalorder %s22, 2
      // Predicated region
      $region77: #{dropgin_forward.1} parent=63 // pred_check
        %p910 = pneg %p909
      $region78: #{dropgin_forward.1} parent=63 // pred_check_branch
        %912 = sbr.rel (%p910) target = $region80
      $region79: #{dropgin_forward.1} parent=63 // pred_region
        %913 = vst [vmem:[#allocation3 + $0x18] sm:$0xff] %v897
      $region80: #{dropgin_forward.1} parent=63 // pred_fallthru
        _
      %p914 = scmp.eq.s32.totalorder %s22, 3
      // Predicated region
      $region81: #{dropgin_forward.1} parent=63 // pred_check
        %p915 = pneg %p914
      $region82: #{dropgin_forward.1} parent=63 // pred_check_branch
        %917 = sbr.rel (%p915) target = $region84
      $region83: #{dropgin_forward.1} parent=63 // pred_region
        %918 = vst [vmem:[#allocation3 + $0x20] sm:$0xff] %v897
        %v919 = vld [vmem:[#allocation3] sm:$0xff]
        %v920 = vld [vmem:[#allocation3 + $0x8] sm:$0xff]
        %v921 = vld [vmem:[#allocation3 + $0x10] sm:$0xff]
        %v922 = vld [vmem:[#allocation3 + $0x18] sm:$0xff]
        %v923 = vld [vmem:[#allocation3 + $0x20] sm:$0xff]
        %v924 = vpack.c.bf16 %v919, %v919
        %v925 = vpack.c.bf16 %v920, %v920
        %v926 = vpack.c.bf16 %v921, %v921
        %v927 = vpack.c.bf16 %v922, %v922
        %v928 = vpack.c.bf16 %v923, %v923
        %v929 = vld [vmem:[%s9] sm:$0xf]
        %v930 = vld [vmem:[%s9 + $0x4] sm:$0xf]
        %v931 = vld [vmem:[%s9 + $0x8] sm:$0xf]
        %v932 = vld [vmem:[%s9 + $0xc] sm:$0xf]
        %v933 = vld [vmem:[%s9 + $0x10] sm:$0xf]
        %v934 = vld [vmem:[%s9 + $0x14] sm:$0xf]
        %v935 = vld [vmem:[%s9 + $0x18] sm:$0xf]
        %v936 = vld [vmem:[%s9 + $0x1c] sm:$0xf]
        %v937 = vld [vmem:[%s9 + $0x20] sm:$0xf]
        %v938 = vld [vmem:[%s9 + $0x24] sm:$0xf]
        %v939 = vld [vmem:[%s9 + $0x28] sm:$0xf]
        %v940 = vld [vmem:[%s9 + $0x2c] sm:$0xf]
        %v941 = vld [vmem:[%s9 + $0x30] sm:$0xf]
        %v942 = vld [vmem:[%s9 + $0x34] sm:$0xf]
        %v943 = vld [vmem:[%s9 + $0x38] sm:$0xf]
        %v944 = vld [vmem:[%s9 + $0x3c] sm:$0xf]
        %v945 = vld [vmem:[%s9 + $0x40] sm:$0xf]
        %v946 = vld [vmem:[%s9 + $0x44] sm:$0xf]
        %v947 = vld [vmem:[%s9 + $0x48] sm:$0xf]
        %v948 = vld [vmem:[%s9 + $0x4c] sm:$0xf]
        %v949 = vld [vmem:[%s9 + $0x50] sm:$0xf]
        %v950 = vld [vmem:[%s9 + $0x54] sm:$0xf]
        %v951 = vld [vmem:[%s9 + $0x58] sm:$0xf]
        %v952 = vld [vmem:[%s9 + $0x5c] sm:$0xf]
        %v953 = vld [vmem:[%s9 + $0x60] sm:$0xf]
        %v954 = vld [vmem:[%s9 + $0x64] sm:$0xf]
        %v955 = vld [vmem:[%s9 + $0x68] sm:$0xf]
        %v956 = vld [vmem:[%s9 + $0x6c] sm:$0xf]
        %v957 = vld [vmem:[%s9 + $0x70] sm:$0xf]
        %v958 = vld [vmem:[%s9 + $0x74] sm:$0xf]
        %v959 = vld [vmem:[%s9 + $0x78] sm:$0xf]
        %v960 = vld [vmem:[%s9 + $0x7c] sm:$0xf]
        %v961 = vld [vmem:[%s9 + $0x80] sm:$0xf]
        %v962 = vld [vmem:[%s9 + $0x84] sm:$0xf]
        %v963 = vld [vmem:[%s9 + $0x88] sm:$0xf]
        %v964 = vld [vmem:[%s9 + $0x8c] sm:$0xf]
        %v965 = vld [vmem:[%s9 + $0x90] sm:$0xf]
        %v966 = vld [vmem:[%s9 + $0x94] sm:$0xf]
        %v967 = vld [vmem:[%s9 + $0x98] sm:$0xf]
        %v968 = vld [vmem:[%s9 + $0x9c] sm:$0xf]
        %v969 = vld [vmem:[%s9 + $0xa0] sm:$0xf]
        %v970 = vld [vmem:[%s9 + $0xa4] sm:$0xf]
        %v971 = vld [vmem:[%s9 + $0xa8] sm:$0xf]
        %v972 = vld [vmem:[%s9 + $0xac] sm:$0xf]
        %v973 = vld [vmem:[%s9 + $0xb0] sm:$0xf]
        %v974 = vld [vmem:[%s9 + $0xb4] sm:$0xf]
        %v975 = vld [vmem:[%s9 + $0xb8] sm:$0xf]
        %v976 = vld [vmem:[%s9 + $0xbc] sm:$0xf]
        %v977 = vld [vmem:[%s9 + $0xc0] sm:$0xf]
        %v978 = vld [vmem:[%s9 + $0xc4] sm:$0xf]
        %v979 = vld [vmem:[%s9 + $0xc8] sm:$0xf]
        %v980 = vld [vmem:[%s9 + $0xcc] sm:$0xf]
        %v981 = vld [vmem:[%s9 + $0xd0] sm:$0xf]
        %v982 = vld [vmem:[%s9 + $0xd4] sm:$0xf]
        %v983 = vld [vmem:[%s9 + $0xd8] sm:$0xf]
        %v984 = vld [vmem:[%s9 + $0xdc] sm:$0xf]
        %v985 = vld [vmem:[%s9 + $0xe0] sm:$0xf]
        %v986 = vld [vmem:[%s9 + $0xe4] sm:$0xf]
        %v987 = vld [vmem:[%s9 + $0xe8] sm:$0xf]
        %v988 = vld [vmem:[%s9 + $0xec] sm:$0xf]
        %v989 = vld [vmem:[%s9 + $0xf0] sm:$0xf]
        %v990 = vld [vmem:[%s9 + $0xf4] sm:$0xf]
        %v991 = vld [vmem:[%s9 + $0xf8] sm:$0xf]
        %v992 = vld [vmem:[%s9 + $0xfc] sm:$0xf]
        %v993 = vld [vmem:[%s9 + $0x100] sm:$0xf]
        %v994 = vld [vmem:[%s9 + $0x104] sm:$0xf]
        %v995 = vld [vmem:[%s9 + $0x108] sm:$0xf]
        %v996 = vld [vmem:[%s9 + $0x10c] sm:$0xf]
        %v997 = vld [vmem:[%s9 + $0x110] sm:$0xf]
        %v998 = vld [vmem:[%s9 + $0x114] sm:$0xf]
        %v999 = vld [vmem:[%s9 + $0x118] sm:$0xf]
        %v1000 = vld [vmem:[%s9 + $0x11c] sm:$0xf]
        %v1001 = vld [vmem:[%s9 + $0x120] sm:$0xf]
        %v1002 = vld [vmem:[%s9 + $0x124] sm:$0xf]
        %v1003 = vld [vmem:[%s9 + $0x128] sm:$0xf]
        %v1004 = vld [vmem:[%s9 + $0x12c] sm:$0xf]
        %v1005 = vld [vmem:[%s9 + $0x130] sm:$0xf]
        %v1006 = vld [vmem:[%s9 + $0x134] sm:$0xf]
        %v1007 = vld [vmem:[%s9 + $0x138] sm:$0xf]
        %v1008 = vld [vmem:[%s9 + $0x13c] sm:$0xf]
        %v1089 = vunpack.c.l.b16 %v929
        %v1090 = vunpack.c.l.b16 %v930
        %v1091 = vunpack.c.l.b16 %v931
        %v1092 = vunpack.c.l.b16 %v932
        %v1093 = vunpack.c.l.b16 %v933
        %v1094 = vunpack.c.l.b16 %v934
        %v1095 = vunpack.c.l.b16 %v935
        %v1096 = vunpack.c.l.b16 %v936
        %v1097 = vunpack.c.l.b16 %v937
        %v1098 = vunpack.c.l.b16 %v938
        %v1099 = vunpack.c.l.b16 %v939
        %v1100 = vunpack.c.l.b16 %v940
        %v1101 = vunpack.c.l.b16 %v941
        %v1102 = vunpack.c.l.b16 %v942
        %v1103 = vunpack.c.l.b16 %v943
        %v1104 = vunpack.c.l.b16 %v944
        %v1105 = vunpack.c.l.b16 %v945
        %v1106 = vunpack.c.l.b16 %v946
        %v1107 = vunpack.c.l.b16 %v947
        %v1108 = vunpack.c.l.b16 %v948
        %v1109 = vunpack.c.l.b16 %v949
        %v1110 = vunpack.c.l.b16 %v950
        %v1111 = vunpack.c.l.b16 %v951
        %v1112 = vunpack.c.l.b16 %v952
        %v1113 = vunpack.c.l.b16 %v953
        %v1114 = vunpack.c.l.b16 %v954
        %v1115 = vunpack.c.l.b16 %v955
        %v1116 = vunpack.c.l.b16 %v956
        %v1117 = vunpack.c.l.b16 %v957
        %v1118 = vunpack.c.l.b16 %v958
        %v1119 = vunpack.c.l.b16 %v959
        %v1120 = vunpack.c.l.b16 %v960
        %v1121 = vunpack.c.l.b16 %v961
        %v1122 = vunpack.c.l.b16 %v962
        %v1123 = vunpack.c.l.b16 %v963
        %v1124 = vunpack.c.l.b16 %v964
        %v1125 = vunpack.c.l.b16 %v965
        %v1126 = vunpack.c.l.b16 %v966
        %v1127 = vunpack.c.l.b16 %v967
        %v1128 = vunpack.c.l.b16 %v968
        %v1129 = vunpack.c.l.b16 %v969
        %v1130 = vunpack.c.l.b16 %v970
        %v1131 = vunpack.c.l.b16 %v971
        %v1132 = vunpack.c.l.b16 %v972
        %v1133 = vunpack.c.l.b16 %v973
        %v1134 = vunpack.c.l.b16 %v974
        %v1135 = vunpack.c.l.b16 %v975
        %v1136 = vunpack.c.l.b16 %v976
        %v1137 = vunpack.c.l.b16 %v977
        %v1138 = vunpack.c.l.b16 %v978
        %v1139 = vunpack.c.l.b16 %v979
        %v1140 = vunpack.c.l.b16 %v980
        %v1141 = vunpack.c.l.b16 %v981
        %v1142 = vunpack.c.l.b16 %v982
        %v1143 = vunpack.c.l.b16 %v983
        %v1144 = vunpack.c.l.b16 %v984
        %v1145 = vunpack.c.l.b16 %v985
        %v1146 = vunpack.c.l.b16 %v986
        %v1147 = vunpack.c.l.b16 %v987
        %v1148 = vunpack.c.l.b16 %v988
        %v1149 = vunpack.c.l.b16 %v989
        %v1150 = vunpack.c.l.b16 %v990
        %v1151 = vunpack.c.l.b16 %v991
        %v1152 = vunpack.c.l.b16 %v992
        %v1153 = vunpack.c.l.b16 %v993
        %v1154 = vunpack.c.l.b16 %v994
        %v1155 = vunpack.c.l.b16 %v995
        %v1156 = vunpack.c.l.b16 %v996
        %v1157 = vunpack.c.l.b16 %v997
        %v1158 = vunpack.c.l.b16 %v998
        %v1159 = vunpack.c.l.b16 %v999
        %v1160 = vunpack.c.l.b16 %v1000
        %v1161 = vunpack.c.l.b16 %v1001
        %v1162 = vunpack.c.l.b16 %v1002
        %v1163 = vunpack.c.l.b16 %v1003
        %v1164 = vunpack.c.l.b16 %v1004
        %v1165 = vunpack.c.l.b16 %v1005
        %v1166 = vunpack.c.l.b16 %v1006
        %v1167 = vunpack.c.l.b16 %v1007
        %v1168 = vunpack.c.l.b16 %v1008
        %v1169 = vpack.c.b16 %v1090, %v1089
        %v1170 = vpack.c.b16 %v1092, %v1091
        %v1171 = vpack.c.b16 %v1094, %v1093
        %v1172 = vpack.c.b16 %v1096, %v1095
        %v1173 = vpack.c.b16 %v1098, %v1097
        %v1174 = vpack.c.b16 %v1100, %v1099
        %v1175 = vpack.c.b16 %v1102, %v1101
        %v1176 = vpack.c.b16 %v1104, %v1103
        %v1177 = vpack.c.b16 %v1106, %v1105
        %v1178 = vpack.c.b16 %v1108, %v1107
        %v1179 = vpack.c.b16 %v1110, %v1109
        %v1180 = vpack.c.b16 %v1112, %v1111
        %v1181 = vpack.c.b16 %v1114, %v1113
        %v1182 = vpack.c.b16 %v1116, %v1115
        %v1183 = vpack.c.b16 %v1118, %v1117
        %v1184 = vpack.c.b16 %v1120, %v1119
        %v1185 = vpack.c.b16 %v1122, %v1121
        %v1186 = vpack.c.b16 %v1124, %v1123
        %v1187 = vpack.c.b16 %v1126, %v1125
        %v1188 = vpack.c.b16 %v1128, %v1127
        %v1189 = vpack.c.b16 %v1130, %v1129
        %v1190 = vpack.c.b16 %v1132, %v1131
        %v1191 = vpack.c.b16 %v1134, %v1133
        %v1192 = vpack.c.b16 %v1136, %v1135
        %v1193 = vpack.c.b16 %v1138, %v1137
        %v1194 = vpack.c.b16 %v1140, %v1139
        %v1195 = vpack.c.b16 %v1142, %v1141
        %v1196 = vpack.c.b16 %v1144, %v1143
        %v1197 = vpack.c.b16 %v1146, %v1145
        %v1198 = vpack.c.b16 %v1148, %v1147
        %v1199 = vpack.c.b16 %v1150, %v1149
        %v1200 = vpack.c.b16 %v1152, %v1151
        %v1201 = vpack.c.b16 %v1154, %v1153
        %v1202 = vpack.c.b16 %v1156, %v1155
        %v1203 = vpack.c.b16 %v1158, %v1157
        %v1204 = vpack.c.b16 %v1160, %v1159
        %v1205 = vpack.c.b16 %v1162, %v1161
        %v1206 = vpack.c.b16 %v1164, %v1163
        %v1207 = vpack.c.b16 %v1166, %v1165
        %v1208 = vpack.c.b16 %v1168, %v1167
        %1249 = vmatpush.bf16.msra.mxu0 %v1176
        %1250 = vmatpush.bf16.msra.mxu0 %v1175
        %1251 = vmatpush.bf16.msra.mxu0 %v1174
        %1252 = vmatpush.bf16.msra.mxu0 %v1173
        %1253 = vmatpush.bf16.msra.mxu0 %v1172
        %1254 = vmatpush.bf16.msra.mxu0 %v1171
        %1255 = vmatpush.bf16.msra.mxu0 %v1170
        %1256 = vmatpush.bf16.msra.mxu0 %v1169
        %1257 = vmatmul.bf16.gmra.mxu0 %v924
        %v1258 = vpop.f32.mrf.mxu0
        %v1259 = vadd.f32 0.0, %v1258
        %v1260 = vpop.f32.mrf.mxu0
        %1261 = vdwg.mxu0
        %1262 = vmatpush.bf16.msra.mxu0 %v1184
        %1263 = vmatpush.bf16.msra.mxu0 %v1183
        %1264 = vmatpush.bf16.msra.mxu0 %v1182
        %1265 = vmatpush.bf16.msra.mxu0 %v1181
        %1266 = vmatpush.bf16.msra.mxu0 %v1180
        %1267 = vmatpush.bf16.msra.mxu0 %v1179
        %1268 = vmatpush.bf16.msra.mxu0 %v1178
        %1269 = vmatpush.bf16.msra.mxu0 %v1177
        %1270 = vmatmul.bf16.gmra.mxu0 %v925
        %v1271 = vpop.f32.mrf.mxu0
        %v1272 = vadd.f32 %v1259, %v1271
        %v1273 = vpop.f32.mrf.mxu0
        %1274 = vdwg.mxu0
        %1275 = vmatpush.bf16.msra.mxu0 %v1192
        %1276 = vmatpush.bf16.msra.mxu0 %v1191
        %1277 = vmatpush.bf16.msra.mxu0 %v1190
        %1278 = vmatpush.bf16.msra.mxu0 %v1189
        %1279 = vmatpush.bf16.msra.mxu0 %v1188
        %1280 = vmatpush.bf16.msra.mxu0 %v1187
        %1281 = vmatpush.bf16.msra.mxu0 %v1186
        %1282 = vmatpush.bf16.msra.mxu0 %v1185
        %1283 = vmatmul.bf16.gmra.mxu0 %v926
        %v1284 = vpop.f32.mrf.mxu0
        %v1285 = vadd.f32 %v1272, %v1284
        %v1286 = vpop.f32.mrf.mxu0
        %1287 = vdwg.mxu0
        %1288 = vmatpush.bf16.msra.mxu0 %v1200
        %1289 = vmatpush.bf16.msra.mxu0 %v1199
        %1290 = vmatpush.bf16.msra.mxu0 %v1198
        %1291 = vmatpush.bf16.msra.mxu0 %v1197
        %1292 = vmatpush.bf16.msra.mxu0 %v1196
        %1293 = vmatpush.bf16.msra.mxu0 %v1195
        %1294 = vmatpush.bf16.msra.mxu0 %v1194
        %1295 = vmatpush.bf16.msra.mxu0 %v1193
        %1296 = vmatmul.bf16.gmra.mxu0 %v927
        %v1297 = vpop.f32.mrf.mxu0
        %v1298 = vadd.f32 %v1285, %v1297
        %v1299 = vpop.f32.mrf.mxu0
        %1300 = vdwg.mxu0
        %1301 = vmatpush.bf16.msra.mxu0 %v1208
        %1302 = vmatpush.bf16.msra.mxu0 %v1207
        %1303 = vmatpush.bf16.msra.mxu0 %v1206
        %1304 = vmatpush.bf16.msra.mxu0 %v1205
        %1305 = vmatpush.bf16.msra.mxu0 %v1204
        %1306 = vmatpush.bf16.msra.mxu0 %v1203
        %1307 = vmatpush.bf16.msra.mxu0 %v1202
        %1308 = vmatpush.bf16.msra.mxu0 %v1201
        %1309 = vmatmul.bf16.gmra.mxu0 %v928
        %v1310 = vpop.f32.mrf.mxu0
        %v1311 = vadd.f32 %v1298, %v1310
        %v1312 = vpop.f32.mrf.mxu0
        %1313 = vdwg.mxu0
        %v1314 = vld [vmem:[%s8] sm:$0xff]
        %1316 = vset.pattern.permute.xlu0 0
        %1317 = vperm.xlu0 %1316, %v1314
        %v1318 = vpop.permute.xlu0 %1317
        %v1320 = vmul.f32 %v1318, %v1311
        %v1321 = vld [vmem:[%s10] sm:$0x1]
        %v1323 = vperm.slane %v1321, 0
        %v1325 = vadd.f32 %v1320, %v1323
        %1326 = vst [vmem:[%s11] sm:$0xff] %v1325
      $region84: #{dropgin_forward.1} parent=63 // pred_fallthru
        _
      // Predicated region
      $region85: #{dropgin_forward.1} parent=63 // pred_check
        %p1327 = pneg %p286
      $region86: #{dropgin_forward.1} parent=63 // pred_check_branch
        %1329 = sbr.rel (%p1327) target = $region88
      $region87: #{dropgin_forward.1} parent=63 // pred_region
        _
      $region88: #{dropgin_forward.1} parent=63 // pred_fallthru
        _
      // Predicated region
      $region89: #{dropgin_forward.1} parent=63 // pred_check
        %p1330 = pneg %p286
      $region90: #{dropgin_forward.1} parent=63 // pred_check_branch
        %1332 = sbr.rel (%p1330) target = $region92
      $region91: #{dropgin_forward.1} parent=63 // pred_region
        _
      $region92: #{dropgin_forward.1} parent=63 // pred_fallthru
        _
    $region64: #{dropgin_forward.1} parent=5 // pred_fallthru
      _
    %p1333 = scmp.le.s32.totalorder 2, %s17
    // Predicated region
    $region93: #{dropgin_forward.1} parent=5 // pred_check
      %p1334 = pneg %p1333
    $region94: #{dropgin_forward.1} parent=5 // pred_check_branch
      %1336 = sbr.rel (%p1334) target = $region96
    $region95: #{dropgin_forward.1} parent=5 // pred_region
      %s1337 = ssub.s32 %s17, 2
    $region96: #{dropgin_forward.1} parent=5 // pred_fallthru
      _
  $region6: #{dropgin_forward.1} parent=0 // loop_footer
    %s21 = sadd.s32 1, %s17
  $region7: #{dropgin_forward.1} parent=0 // loop_footer_branch
    %16 = sbr.rel target = $region3
  $region8: #{dropgin_forward.1} parent=0 // loop_exit
    _

</llo_original>
